<compile_context>
chip_gen: v7x
topology: tpu7x:2x2x1
jax: 0.10.0
libtpu: 0.0.40
codegen_flags: <defaults>
</compile_context>

<pallas_src>
import jax
import jax.numpy as jnp
from jax.experimental import pallas as pl
from jax.experimental.pallas import tpu as pltpu


_ACTIVATIONS = {
    "relu": lambda v: jnp.maximum(v, 0.0),
    "sigmoid": jax.nn.sigmoid,
    "softplus": jax.nn.softplus,
    "logsigmoid": jax.nn.log_sigmoid,
    "softsign": jax.nn.soft_sign,
    "tanh": jnp.tanh,
}


def _make_kernel(n_hidden_blocks, activation):
    """n_hidden_blocks = 1 (conv2/bn2) + num_layers (conv_list/bn_list)."""
    act = _ACTIVATIONS[activation]

    def kernel(*refs):
        feat_ref, lat_ref = refs[0], refs[1]          # (TN, bneck), (1, 1, bneck)
        idx = 2
        blocks = []
        for _ in range(n_hidden_blocks):              # BN-folded hidden convs
            blocks.append((refs[idx], refs[idx + 1]))
            idx += 2
        wlt_ref, blt_ref = refs[idx], refs[idx + 1]   # last_conv: (dout, hid), (dout, 1)
        out_ref = refs[idx + 2]                       # (1, dout, TN)

        # layer 1: act(bn1(conv1(x) + latent)) -- conv1/bn1 folded into `feat`
        # (wrapper) and latent folded into the per-batch bias.
        h = act(feat_ref[...] + lat_ref[0])

        # hidden blocks: act(bn(conv(h))) with BN folded into W/b
        for w_ref, b_ref in blocks:
            h = act(jnp.dot(h, w_ref[...], preferred_element_type=jnp.float32)
                    + b_ref[...])

        # last_conv, emitted lane-dense: (dout, TN)
        h_t = jnp.transpose(h)                        # (hidden, TN) -- aligned XLU transpose
        y_t = jnp.dot(wlt_ref[...], h_t, preferred_element_type=jnp.float32)
        out_ref[...] = (y_t + blt_ref[...])[None].astype(out_ref.dtype)

    return kernel


def mapping2d_to_3d(x, latent, params, *, activation="relu", tile_n=512, eps=1e-5):
    """x: (1, dim_template, N), latent: (B, bottleneck, 1) -> (B, 3, N)."""
    convs, bns = params["convs"], params["bns"]
    n_hidden_blocks = len(convs) - 2                  # conv2 + conv_list
    B = latent.shape[0]
    N = x.shape[2]
    bottleneck = convs[0][0].shape[1]
    hidden = convs[1][0].shape[1]
    dout = convs[-1][0].shape[1]

    def fold(i):
        gamma, beta, mean, var = bns[i]
        scale = gamma / jnp.sqrt(var + eps)
        shift = beta - mean * scale
        return scale, shift

    # --- layer 1: fold BN1 into conv1, latent into per-batch bias ------------
    w1, b1 = convs[0]
    s1, t1 = fold(0)
    w1f = w1 * s1[None, :]                                         # (din, bottleneck)
    lat = latent[:, :, 0]                                          # (B, bottleneck)
    lat_bias = ((lat + b1[None, :]) * s1[None, :] + t1[None, :])[:, None, :]

    # conv1 is batch-independent -> hoist it out of the kernel entirely.
    x2d = jnp.transpose(x[0])                                      # (N, din)
    feat = jnp.dot(x2d, w1f, precision=jax.lax.Precision.HIGHEST)  # (N, bottleneck)

    # --- hidden blocks + last conv (BN folded into W/b) -----------------------
    flat = []
    for i in range(1, len(convs) - 1):
        w, b = convs[i]
        s, t = fold(i)
        flat += [w * s[None, :], (b * s + t).reshape(1, -1)]
    wl, bl = convs[-1]
    flat += [jnp.transpose(wl), bl.reshape(-1, 1)]                 # (dout, hid), (dout, 1)

    # --- tiling / padding ------------------------------------------------------
    tile_n = max(128, (int(tile_n) // 128) * 128)
    n_pad = pl.cdiv(N, tile_n) * tile_n
    if n_pad != N:
        feat = jnp.pad(feat, ((0, n_pad - N), (0, 0)))
    n_tiles = n_pad // tile_n

    grid = (n_tiles, B)               # batch innermost: feat tile reused across B
    feat_spec = pl.BlockSpec((tile_n, bottleneck), lambda n, b: (n, 0))
    lat_spec = pl.BlockSpec((1, 1, bottleneck), lambda n, b: (b, 0, 0))
    param_specs = [pl.BlockSpec(p.shape, lambda n, b: (0, 0)) for p in flat]
    out_spec = pl.BlockSpec((1, dout, tile_n), lambda n, b: (b, 0, n))

    # Explicit VMEM budget: double-buffered params + activations, v7x-safe cap.
    param_bytes = sum(int(p.size) * p.dtype.itemsize for p in flat)
    act_bytes = 4 * tile_n * max(bottleneck, hidden)
    vmem_limit = int(min(max(2 * param_bytes + 12 * act_bytes + (2 << 20), 8 << 20),
                         64 << 20))

    out = pl.pallas_call(
        _make_kernel(n_hidden_blocks, activation),
        out_shape=jax.ShapeDtypeStruct((B, dout, n_pad), x.dtype),
        grid_spec=pltpu.PrefetchScalarGridSpec(
            num_scalar_prefetch=0,
            grid=grid,
            in_specs=[feat_spec, lat_spec] + param_specs,
            out_specs=out_spec,
        ),
        compiler_params=pltpu.CompilerParams(
            dimension_semantics=("parallel", "parallel"),
            vmem_limit_bytes=vmem_limit),
    )(feat, lat_bias, *flat)

    return out[:, :, :N] if n_pad != N else out     # (B, 3, N), matches PyTorch


def init_params(key, din, bottleneck, hidden, num_layers, dout=3):
    keys = iter(jax.random.split(key, 8 * (num_layers + 4)))

    def conv(cin, cout):
        # Conv1d(k=1) weight stored pre-transposed as (in, out) for h @ W.
        w = jax.random.normal(next(keys), (cin, cout), jnp.float32)
        w = w * (1.0 / jnp.sqrt(jnp.float32(cin)))
        b = 0.05 * jax.random.normal(next(keys), (cout,), jnp.float32)
        return (w, b)

    def bn(c):
        gamma = 1.0 + 0.1 * jax.random.normal(next(keys), (c,), jnp.float32)
        beta = 0.1 * jax.random.normal(next(keys), (c,), jnp.float32)
        mean = 0.1 * jax.random.normal(next(keys), (c,), jnp.float32)
        var = 1.0 + 0.2 * jax.random.uniform(next(keys), (c,), jnp.float32)
        return (gamma, beta, mean, var)                # eval-mode running stats

    convs = [conv(din, bottleneck), conv(bottleneck, hidden)]
    bns = [bn(bottleneck), bn(hidden)]
    for _ in range(num_layers):
        convs.append(conv(hidden, hidden))
        bns.append(bn(hidden))
    convs.append(conv(hidden, dout))                   # last_conv, no BN
    return {"convs": convs, "bns": bns}


def reference(x, latent, params, *, activation="relu", eps=1e-5):
    """Pure-JAX reference of the PyTorch forward (eval-mode BN, unfused)."""
    act = _ACTIVATIONS[activation]
    convs, bns = params["convs"], params["bns"]
    hp = jax.lax.Precision.HIGHEST

    def bn_apply(h, i):
        gamma, beta, mean, var = bns[i]
        return (h - mean) * (gamma / jnp.sqrt(var + eps)) + beta

    x2d = jnp.transpose(x[0])                          # (N, din)
    lat = latent[:, :, 0]                              # (B, bottleneck)
    h = jnp.dot(x2d, convs[0][0], precision=hp) + convs[0][1]   # conv1
    h = h[None] + lat[:, None, :]                      # + latent (broadcast over points)
    h = act(bn_apply(h, 0))
    for i in range(1, len(convs) - 1):
        h = act(bn_apply(jnp.dot(h, convs[i][0], precision=hp) + convs[i][1], i))
    y = jnp.dot(h, convs[-1][0], precision=hp) + convs[-1][1]   # last_conv
    return jnp.transpose(y, (0, 2, 1))                 # (B, 3, N)


if __name__ == "__main__":
    B, N = 2, 1024
    dim_template, bottleneck_size, hidden_neurons, num_layers = 3, 128, 128, 2

    key = jax.random.PRNGKey(0)
    kx, kl, kp = jax.random.split(key, 3)
    x = jax.random.normal(kx, (1, dim_template, N), jnp.float32)
    latent = jax.random.normal(kl, (B, bottleneck_size, 1), jnp.float32)
    params = init_params(kp, dim_template, bottleneck_size,
                         hidden_neurons, num_layers)

    out = mapping2d_to_3d(x, latent, params, tile_n=512)
    out = jax.block_until_ready(out)

    ref = reference(x, latent, params)
    assert out.shape == (B, 3, N), out.shape
    max_err = float(jnp.max(jnp.abs(out - ref)))
    assert max_err < 2e-3, f"max abs error {max_err}"
    print("KERNEL_OK")
</pallas_src>

<mosaic_0001>
module attributes {stable_mosaic.version = 11 : i64} {
  func.func @kernel(%arg0: i32, %arg1: i32, %arg2: memref<512x128xf32, #tpu.memory_space<vmem>>, %arg3: memref<1x1x128xf32, #tpu.memory_space<vmem>>, %arg4: memref<128x128xf32, #tpu.memory_space<vmem>>, %arg5: memref<1x128xf32, #tpu.memory_space<vmem>>, %arg6: memref<128x128xf32, #tpu.memory_space<vmem>>, %arg7: memref<1x128xf32, #tpu.memory_space<vmem>>, %arg8: memref<128x128xf32, #tpu.memory_space<vmem>>, %arg9: memref<1x128xf32, #tpu.memory_space<vmem>>, %arg10: memref<3x128xf32, #tpu.memory_space<vmem>>, %arg11: memref<3x1xf32, #tpu.memory_space<vmem>>, %arg12: memref<1x3x512xf32, #tpu.memory_space<vmem>>) attributes {dimension_semantics = [#tpu.dimension_semantics<parallel>, #tpu.dimension_semantics<parallel>], iteration_bounds = array<i64: 2, 2>, scalar_prefetch = 0 : i64, scratch_operands = 0 : i64, tpu.core_type = #tpu.core_type<tc>, window_params = [{transform_indices = @transform_0, window_bounds = array<i64: 512, 128>}, {transform_indices = @transform_1, window_bounds = array<i64: 1, 1, 128>}, {pipeline_mode = #tpu.pipeline_mode<synchronous>, transform_indices = @transform_2, window_bounds = array<i64: 128, 128>}, {pipeline_mode = #tpu.pipeline_mode<synchronous>, transform_indices = @transform_3, window_bounds = array<i64: 1, 128>}, {pipeline_mode = #tpu.pipeline_mode<synchronous>, transform_indices = @transform_4, window_bounds = array<i64: 128, 128>}, {pipeline_mode = #tpu.pipeline_mode<synchronous>, transform_indices = @transform_5, window_bounds = array<i64: 1, 128>}, {pipeline_mode = #tpu.pipeline_mode<synchronous>, transform_indices = @transform_6, window_bounds = array<i64: 128, 128>}, {pipeline_mode = #tpu.pipeline_mode<synchronous>, transform_indices = @transform_7, window_bounds = array<i64: 1, 128>}, {pipeline_mode = #tpu.pipeline_mode<synchronous>, transform_indices = @transform_8, window_bounds = array<i64: 3, 128>}, {pipeline_mode = #tpu.pipeline_mode<synchronous>, transform_indices = @transform_9, window_bounds = array<i64: 3, 1>}, {transform_indices = @transform_10, window_bounds = array<i64: 1, 3, 512>}]} {
    %c0 = arith.constant 0 : index
    %c0_0 = arith.constant 0 : index
    %0 = vector.load %arg2[%c0, %c0_0] : memref<512x128xf32, #tpu.memory_space<vmem>>, vector<512x128xf32>
    %c0_1 = arith.constant 0 : index
    %c0_2 = arith.constant 0 : index
    %c0_3 = arith.constant 0 : index
    %1 = vector.load %arg3[%c0_1, %c0_2, %c0_3] : memref<1x1x128xf32, #tpu.memory_space<vmem>>, vector<1x1x128xf32>
    %2 = vector.shape_cast %1 : vector<1x1x128xf32> to vector<1x128xf32>
    %3 = vector.broadcast %2 : vector<1x128xf32> to vector<512x128xf32>
    %4 = arith.addf %0, %3 : vector<512x128xf32>
    %cst = arith.constant 0.000000e+00 : f32
    %5 = vector.broadcast %cst : f32 to vector<512x128xf32>
    %6 = arith.maximumf %4, %5 : vector<512x128xf32>
    %c0_4 = arith.constant 0 : index
    %c0_5 = arith.constant 0 : index
    %7 = vector.load %arg4[%c0_4, %c0_5] : memref<128x128xf32, #tpu.memory_space<vmem>>, vector<128x128xf32>
    %cst_6 = arith.constant dense<0.000000e+00> : vector<512x128xf32>
    %8 = tpu.matmul %6, %7, %cst_6 {dimension_numbers = #tpu.dot_dimension_numbers<[1], [0], [0], [1], [0, 0, 1, 1], [], []>} : vector<512x128xf32>, vector<128x128xf32>, vector<512x128xf32> -> vector<512x128xf32>
    %c0_7 = arith.constant 0 : index
    %c0_8 = arith.constant 0 : index
    %9 = vector.load %arg5[%c0_7, %c0_8] : memref<1x128xf32, #tpu.memory_space<vmem>>, vector<1x128xf32>
    %10 = vector.broadcast %9 : vector<1x128xf32> to vector<512x128xf32>
    %11 = arith.addf %8, %10 : vector<512x128xf32>
    %cst_9 = arith.constant 0.000000e+00 : f32
    %12 = vector.broadcast %cst_9 : f32 to vector<512x128xf32>
    %13 = arith.maximumf %11, %12 : vector<512x128xf32>
    %c0_10 = arith.constant 0 : index
    %c0_11 = arith.constant 0 : index
    %14 = vector.load %arg6[%c0_10, %c0_11] : memref<128x128xf32, #tpu.memory_space<vmem>>, vector<128x128xf32>
    %cst_12 = arith.constant dense<0.000000e+00> : vector<512x128xf32>
    %15 = tpu.matmul %13, %14, %cst_12 {dimension_numbers = #tpu.dot_dimension_numbers<[1], [0], [0], [1], [0, 0, 1, 1], [], []>} : vector<512x128xf32>, vector<128x128xf32>, vector<512x128xf32> -> vector<512x128xf32>
    %c0_13 = arith.constant 0 : index
    %c0_14 = arith.constant 0 : index
    %16 = vector.load %arg7[%c0_13, %c0_14] : memref<1x128xf32, #tpu.memory_space<vmem>>, vector<1x128xf32>
    %17 = vector.broadcast %16 : vector<1x128xf32> to vector<512x128xf32>
    %18 = arith.addf %15, %17 : vector<512x128xf32>
    %cst_15 = arith.constant 0.000000e+00 : f32
    %19 = vector.broadcast %cst_15 : f32 to vector<512x128xf32>
    %20 = arith.maximumf %18, %19 : vector<512x128xf32>
    %c0_16 = arith.constant 0 : index
    %c0_17 = arith.constant 0 : index
    %21 = vector.load %arg8[%c0_16, %c0_17] : memref<128x128xf32, #tpu.memory_space<vmem>>, vector<128x128xf32>
    %cst_18 = arith.constant dense<0.000000e+00> : vector<512x128xf32>
    %22 = tpu.matmul %20, %21, %cst_18 {dimension_numbers = #tpu.dot_dimension_numbers<[1], [0], [0], [1], [0, 0, 1, 1], [], []>} : vector<512x128xf32>, vector<128x128xf32>, vector<512x128xf32> -> vector<512x128xf32>
    %c0_19 = arith.constant 0 : index
    %c0_20 = arith.constant 0 : index
    %23 = vector.load %arg9[%c0_19, %c0_20] : memref<1x128xf32, #tpu.memory_space<vmem>>, vector<1x128xf32>
    %24 = vector.broadcast %23 : vector<1x128xf32> to vector<512x128xf32>
    %25 = arith.addf %22, %24 : vector<512x128xf32>
    %cst_21 = arith.constant 0.000000e+00 : f32
    %26 = vector.broadcast %cst_21 : f32 to vector<512x128xf32>
    %27 = arith.maximumf %25, %26 : vector<512x128xf32>
    %28 = tpu.transpose %27, [1, 0] : vector<512x128xf32> -> vector<128x512xf32>
    %c0_22 = arith.constant 0 : index
    %c0_23 = arith.constant 0 : index
    %29 = vector.load %arg10[%c0_22, %c0_23] : memref<3x128xf32, #tpu.memory_space<vmem>>, vector<3x128xf32>
    %cst_24 = arith.constant dense<0.000000e+00> : vector<3x512xf32>
    %30 = tpu.matmul %29, %28, %cst_24 {dimension_numbers = #tpu.dot_dimension_numbers<[1], [0], [0], [1], [0, 0, 1, 1], [], []>} : vector<3x128xf32>, vector<128x512xf32>, vector<3x512xf32> -> vector<3x512xf32>
    %c0_25 = arith.constant 0 : index
    %c0_26 = arith.constant 0 : index
    %31 = vector.load %arg11[%c0_25, %c0_26] : memref<3x1xf32, #tpu.memory_space<vmem>>, vector<3x1xf32>
    %32 = vector.broadcast %31 : vector<3x1xf32> to vector<3x512xf32>
    %33 = arith.addf %30, %32 : vector<3x512xf32>
    %34 = vector.shape_cast %33 : vector<3x512xf32> to vector<1x3x512xf32>
    %c0_27 = arith.constant 0 : index
    %c0_28 = arith.constant 0 : index
    %c0_29 = arith.constant 0 : index
    %35 = vector.load %arg12[%c0_27, %c0_28, %c0_29] : memref<1x3x512xf32, #tpu.memory_space<vmem>>, vector<1x3x512xf32>
    tpu.vector_store %arg12[%c0_27, %c0_28, %c0_29], %34 {strides = array<i32>} : memref<1x3x512xf32, #tpu.memory_space<vmem>>, vector<1x3x512xf32>,
    return
  }
  func.func @transform_0(%arg0: i32, %arg1: i32) -> (i32, i32) {
    %c0_i32 = arith.constant 0 : i32
    %c0_i32_0 = arith.constant 0 : i32
    return %arg0, %c0_i32 : i32, i32
  }
  func.func @transform_1(%arg0: i32, %arg1: i32) -> (i32, i32, i32) {
    %c0_i32 = arith.constant 0 : i32
    %c0_i32_0 = arith.constant 0 : i32
    %c0_i32_1 = arith.constant 0 : i32
    return %arg1, %c0_i32, %c0_i32_0 : i32, i32, i32
  }
  func.func @transform_2(%arg0: i32, %arg1: i32) -> (i32, i32) {
    %c0_i32 = arith.constant 0 : i32
    %c0_i32_0 = arith.constant 0 : i32
    %c0_i32_1 = arith.constant 0 : i32
    return %c0_i32, %c0_i32_0 : i32, i32
  }
  func.func @transform_3(%arg0: i32, %arg1: i32) -> (i32, i32) {
    %c0_i32 = arith.constant 0 : i32
    %c0_i32_0 = arith.constant 0 : i32
    %c0_i32_1 = arith.constant 0 : i32
    return %c0_i32, %c0_i32_0 : i32, i32
  }
  func.func @transform_4(%arg0: i32, %arg1: i32) -> (i32, i32) {
    %c0_i32 = arith.constant 0 : i32
    %c0_i32_0 = arith.constant 0 : i32
    %c0_i32_1 = arith.constant 0 : i32
    return %c0_i32, %c0_i32_0 : i32, i32
  }
  func.func @transform_5(%arg0: i32, %arg1: i32) -> (i32, i32) {
    %c0_i32 = arith.constant 0 : i32
    %c0_i32_0 = arith.constant 0 : i32
    %c0_i32_1 = arith.constant 0 : i32
    return %c0_i32, %c0_i32_0 : i32, i32
  }
  func.func @transform_6(%arg0: i32, %arg1: i32) -> (i32, i32) {
    %c0_i32 = arith.constant 0 : i32
    %c0_i32_0 = arith.constant 0 : i32
    %c0_i32_1 = arith.constant 0 : i32
    return %c0_i32, %c0_i32_0 : i32, i32
  }
  func.func @transform_7(%arg0: i32, %arg1: i32) -> (i32, i32) {
    %c0_i32 = arith.constant 0 : i32
    %c0_i32_0 = arith.constant 0 : i32
    %c0_i32_1 = arith.constant 0 : i32
    return %c0_i32, %c0_i32_0 : i32, i32
  }
  func.func @transform_8(%arg0: i32, %arg1: i32) -> (i32, i32) {
    %c0_i32 = arith.constant 0 : i32
    %c0_i32_0 = arith.constant 0 : i32
    %c0_i32_1 = arith.constant 0 : i32
    return %c0_i32, %c0_i32_0 : i32, i32
  }
  func.func @transform_9(%arg0: i32, %arg1: i32) -> (i32, i32) {
    %c0_i32 = arith.constant 0 : i32
    %c0_i32_0 = arith.constant 0 : i32
    %c0_i32_1 = arith.constant 0 : i32
    return %c0_i32, %c0_i32_0 : i32, i32
  }
  func.func @transform_10(%arg0: i32, %arg1: i32) -> (i32, i32, i32) {
    %c0_i32 = arith.constant 0 : i32
    %c0_i32_0 = arith.constant 0 : i32
    return %arg1, %c0_i32, %arg0 : i32, i32, i32
  }
}

</mosaic_0001>

<llo_original>
// kernel: tpu_custom_call.1
$region0: #{tpu_custom_call.1}
  #allocation0 [shape = 'u32[]', space=smem, size = 0x4, offset = 0x4, fixed_abs, tag = 'smem constant byte address 0x4 - core index']
  #allocation1 [shape = 'u32[144,128]{1,0:T(1,128)}', space=vmem, size = 0x12000, scoped, tag = 'internal scratch']
  %s0 = inlined_call_operand.hbm [shape: f32[1024,128], index: 0, kind: input, shape index: {}]
  %s1 = inlined_call_operand.vmem [shape: f32[2,1,128], index: 1, kind: input, shape index: {}]
  %s2 = inlined_call_operand.hbm [shape: f32[128,128], index: 2, kind: input, shape index: {}]
  %s3 = inlined_call_operand.vmem [shape: f32[1,128], index: 3, kind: input, shape index: {}]
  %s4 = inlined_call_operand.hbm [shape: f32[128,128], index: 4, kind: input, shape index: {}]
  %s5 = inlined_call_operand.vmem [shape: f32[1,128], index: 5, kind: input, shape index: {}]
  %s6 = inlined_call_operand.hbm [shape: f32[128,128], index: 6, kind: input, shape index: {}]
  %s7 = inlined_call_operand.vmem [shape: f32[1,128], index: 7, kind: input, shape index: {}]
  %s8 = inlined_call_operand.vmem [shape: f32[3,128], index: 8, kind: input, shape index: {}]
  %s9 = inlined_call_operand.vmem [shape: f32[3,1], index: 9, kind: input, shape index: {}]
  %s10 = inlined_call_operand.vmem [shape: f32[2,3,1024], index: 10, kind: output, shape index: {}]
  %s11 = sld [smem:[#allocation0]]
  $region89: #{tpu_custom_call.1} parent=0
    _
  %s13 = ssub.s32 1, %s11
  %s14 = scalar_select 0, %s13, %s11
  $region1: #{tpu_custom_call.1} parent=0
    #allocation2 [shape = 'u8[524288]{0}', space=vmem, size = 0x80000, scoped, tag = 'input window, operand 0']
    #allocation3 [shape = 's32[2]{0}', space=sflag, size = 0x8, scoped, tag = 'scoped memory for tpu_custom_call.1']
    #allocation4 [shape = 'u8[65536]{0}', space=vmem, size = 0x10000, scoped, tag = 'input window, operand 2, single buffered']
    #allocation5 [shape = 's32[1]{0}', space=sflag, size = 0x4, scoped, tag = 'scoped memory for tpu_custom_call.1']
    #allocation6 [shape = 'u8[65536]{0}', space=vmem, size = 0x10000, scoped, tag = 'input window, operand 4, single buffered']
    #allocation7 [shape = 'u8[65536]{0}', space=vmem, size = 0x10000, scoped, tag = 'input window, operand 6, single buffered']
    #allocation8 [shape = 's32[1]{0}', space=sflag, size = 0x4, scoped, tag = 'scoped memory for tpu_custom_call.1']
    %15 = vsyncpa [#allocation3], 0
    %s16 = scalar_lea.sflag [#allocation3], 1
    %17 = vsyncpa %s16, 0
    %18 = vsyncpa [#allocation5], 0
    %19 = vsyncpa [#allocation8], 0
    loop: start=0, step=1, limit=6
    $region2: #{tpu_custom_call.1} parent=1 // loop_pre_header
      _
    $region3: #{tpu_custom_call.1} parent=1 // loop_header
      %s21 = sphi 0, %s25
      %p22 = scmp.ge.s32.totalorder %s21, 6
      %s28 = sphi 0, %s40
      %s29 = sphi 0, %s36
      %s30 = sphi 0, %s28
      %s31 = sphi 0, %s29
      %s32 = sphi 0, %s30
      %s33 = sphi 0, %s31
      %s43 = sphi 0, %s45
      %s46 = sphi 0, %s43
      %s47 = sphi 0, %s46
      %s63 = sphi 0, %s47
      %s69 = sphi 0, %s71
      %s72 = sphi 0, %s69
      %s73 = sphi 0, %s72
      %s89 = sphi 0, %s73
      %s93 = sphi 0, %s93
      %s95 = sphi 0, %s93
      %s96 = sphi 0, %s95
      %s110 = sphi 0, %s96
      %s114 = sphi 0, %s114
      %s116 = sphi 0, %s114
      %s117 = sphi 0, %s116
      %s131 = sphi 0, %s117
      %s135 = sphi 0, %s135
      %s137 = sphi 0, %s135
      %s138 = sphi 0, %s137
      %s152 = sphi 0, %s138
      %s156 = sphi 0, %s156
      %s158 = sphi 0, %s156
      %s159 = sphi 0, %s158
      %s173 = sphi 0, %s159
      %s177 = sphi 0, %s177
      %s179 = sphi 0, %s177
      %s180 = sphi 0, %s179
      %s194 = sphi 0, %s180
      %s198 = sphi 0, %s198
      %s200 = sphi 0, %s198
      %s201 = sphi 0, %s200
      %s215 = sphi 0, %s201
      %s219 = sphi 0, %s219
      %s221 = sphi 0, %s219
      %s222 = sphi 0, %s221
      %s236 = sphi 0, %s222
      %s240 = sphi 0, %s240
      %s242 = sphi 0, %s240
      %s243 = sphi 0, %s242
      %s257 = sphi 0, %s243
      %s265 = sphi 0, %s267
      %s268 = sphi 0, %s265
      %s269 = sphi 0, %s268
      %s285 = sphi 0, %s269
    $region4: #{tpu_custom_call.1} parent=1 // loop_header_branch
      %24 = sbr.rel (%p22) target = $region8
    $region5: #{tpu_custom_call.1} parent=1 // loop_body
      %s26 = ssub.s32 %s21, 1
      %s27 = ssub.s32 %s21, 2
      %s34 = sadd.s32 1, %s29
      %p35 = scmp.ge.s32.totalorder %s34, 2
      %s36 = scalar_select %p35, 0, %s34
      %s37 = sadd.s32 1, %s28
      %s38 = scalar_select %p35, %s37, %s28
      %p39 = scmp.ge.s32.totalorder %s38, 2
      %s40 = scalar_select %p39, 0, %s38
      %s41 = ssub.s32 %s28, %s40
      %p42 = scmp.eq.s32.totalorder %s41, 0
      %s44 = sadd.s32 %s43, 1
      %s45 = scalar_select %p42, %s43, %s44
      %p48 = pneg %p42
      %p49 = scmp.eq.s32.totalorder %s21, 3
      %p50 = por %p48, %p49
      %p51 = scmp.ne.s32.totalorder %s43, %s46
      %p52 = scmp.eq.s32.totalorder %s21, 0
      %p53 = por %p51, %p52
      %p54 = scmp.ne.s32.totalorder %s43, %s46
      %p55 = scmp.eq.s32.totalorder %s26, 3
      %p56 = por %p54, %p55
      %p57 = scmp.ne.s32.totalorder %s46, %s47
      %p58 = scmp.eq.s32.totalorder %s26, 0
      %p59 = por %p57, %p58
      %p60 = scmp.ne.s32.totalorder %s46, %s47
      %p61 = scmp.eq.s32.totalorder %s27, 3
      %p62 = por %p60, %p61
      %p64 = scmp.ne.s32.totalorder %s47, %s63
      %p65 = scmp.eq.s32.totalorder %s27, 0
      %p66 = por %p64, %p65
      %s67 = ssub.s32 %s29, %s36
      %p68 = scmp.eq.s32.totalorder %s67, 0
      %s70 = sadd.s32 %s69, 1
      %s71 = scalar_select %p68, %s69, %s70
      %p74 = pneg %p68
      %p75 = scmp.eq.s32.totalorder %s21, 3
      %p76 = por %p74, %p75
      %p77 = scmp.ne.s32.totalorder %s69, %s72
      %p78 = scmp.eq.s32.totalorder %s21, 0
      %p79 = por %p77, %p78
      %p80 = scmp.ne.s32.totalorder %s69, %s72
      %p81 = scmp.eq.s32.totalorder %s26, 3
      %p82 = por %p80, %p81
      %p83 = scmp.ne.s32.totalorder %s72, %s73
      %p84 = scmp.eq.s32.totalorder %s26, 0
      %p85 = por %p83, %p84
      %p86 = scmp.ne.s32.totalorder %s72, %s73
      %p87 = scmp.eq.s32.totalorder %s27, 3
      %p88 = por %p86, %p87
      %p90 = scmp.ne.s32.totalorder %s73, %s89
      %p91 = scmp.eq.s32.totalorder %s27, 0
      %p92 = por %p90, %p91
      %s94 = sadd.s32 %s93, 1
      %p97 = scmp.eq.s32.totalorder %s21, 3
      %p98 = scmp.ne.s32.totalorder %s93, %s95
      %p99 = scmp.eq.s32.totalorder %s21, 0
      %p100 = por %p98, %p99
      %p101 = scmp.ne.s32.totalorder %s93, %s95
      %p102 = scmp.eq.s32.totalorder %s26, 3
      %p103 = por %p101, %p102
      %p104 = scmp.ne.s32.totalorder %s95, %s96
      %p105 = scmp.eq.s32.totalorder %s26, 0
      %p106 = por %p104, %p105
      %p107 = scmp.ne.s32.totalorder %s95, %s96
      %p108 = scmp.eq.s32.totalorder %s27, 3
      %p109 = por %p107, %p108
      %p111 = scmp.ne.s32.totalorder %s96, %s110
      %p112 = scmp.eq.s32.totalorder %s27, 0
      %p113 = por %p111, %p112
      %s115 = sadd.s32 %s114, 1
      %p118 = scmp.eq.s32.totalorder %s21, 3
      %p119 = scmp.ne.s32.totalorder %s114, %s116
      %p120 = scmp.eq.s32.totalorder %s21, 0
      %p121 = por %p119, %p120
      %p122 = scmp.ne.s32.totalorder %s114, %s116
      %p123 = scmp.eq.s32.totalorder %s26, 3
      %p124 = por %p122, %p123
      %p125 = scmp.ne.s32.totalorder %s116, %s117
      %p126 = scmp.eq.s32.totalorder %s26, 0
      %p127 = por %p125, %p126
      %p128 = scmp.ne.s32.totalorder %s116, %s117
      %p129 = scmp.eq.s32.totalorder %s27, 3
      %p130 = por %p128, %p129
      %p132 = scmp.ne.s32.totalorder %s117, %s131
      %p133 = scmp.eq.s32.totalorder %s27, 0
      %p134 = por %p132, %p133
      %s136 = sadd.s32 %s135, 1
      %p139 = scmp.eq.s32.totalorder %s21, 3
      %p140 = scmp.ne.s32.totalorder %s135, %s137
      %p141 = scmp.eq.s32.totalorder %s21, 0
      %p142 = por %p140, %p141
      %p143 = scmp.ne.s32.totalorder %s135, %s137
      %p144 = scmp.eq.s32.totalorder %s26, 3
      %p145 = por %p143, %p144
      %p146 = scmp.ne.s32.totalorder %s137, %s138
      %p147 = scmp.eq.s32.totalorder %s26, 0
      %p148 = por %p146, %p147
      %p149 = scmp.ne.s32.totalorder %s137, %s138
      %p150 = scmp.eq.s32.totalorder %s27, 3
      %p151 = por %p149, %p150
      %p153 = scmp.ne.s32.totalorder %s138, %s152
      %p154 = scmp.eq.s32.totalorder %s27, 0
      %p155 = por %p153, %p154
      %s157 = sadd.s32 %s156, 1
      %p160 = scmp.eq.s32.totalorder %s21, 3
      %p161 = scmp.ne.s32.totalorder %s156, %s158
      %p162 = scmp.eq.s32.totalorder %s21, 0
      %p163 = por %p161, %p162
      %p164 = scmp.ne.s32.totalorder %s156, %s158
      %p165 = scmp.eq.s32.totalorder %s26, 3
      %p166 = por %p164, %p165
      %p167 = scmp.ne.s32.totalorder %s158, %s159
      %p168 = scmp.eq.s32.totalorder %s26, 0
      %p169 = por %p167, %p168
      %p170 = scmp.ne.s32.totalorder %s158, %s159
      %p171 = scmp.eq.s32.totalorder %s27, 3
      %p172 = por %p170, %p171
      %p174 = scmp.ne.s32.totalorder %s159, %s173
      %p175 = scmp.eq.s32.totalorder %s27, 0
      %p176 = por %p174, %p175
      %s178 = sadd.s32 %s177, 1
      %p181 = scmp.eq.s32.totalorder %s21, 3
      %p182 = scmp.ne.s32.totalorder %s177, %s179
      %p183 = scmp.eq.s32.totalorder %s21, 0
      %p184 = por %p182, %p183
      %p185 = scmp.ne.s32.totalorder %s177, %s179
      %p186 = scmp.eq.s32.totalorder %s26, 3
      %p187 = por %p185, %p186
      %p188 = scmp.ne.s32.totalorder %s179, %s180
      %p189 = scmp.eq.s32.totalorder %s26, 0
      %p190 = por %p188, %p189
      %p191 = scmp.ne.s32.totalorder %s179, %s180
      %p192 = scmp.eq.s32.totalorder %s27, 3
      %p193 = por %p191, %p192
      %p195 = scmp.ne.s32.totalorder %s180, %s194
      %p196 = scmp.eq.s32.totalorder %s27, 0
      %p197 = por %p195, %p196
      %s199 = sadd.s32 %s198, 1
      %p202 = scmp.eq.s32.totalorder %s21, 3
      %p203 = scmp.ne.s32.totalorder %s198, %s200
      %p204 = scmp.eq.s32.totalorder %s21, 0
      %p205 = por %p203, %p204
      %p206 = scmp.ne.s32.totalorder %s198, %s200
      %p207 = scmp.eq.s32.totalorder %s26, 3
      %p208 = por %p206, %p207
      %p209 = scmp.ne.s32.totalorder %s200, %s201
      %p210 = scmp.eq.s32.totalorder %s26, 0
      %p211 = por %p209, %p210
      %p212 = scmp.ne.s32.totalorder %s200, %s201
      %p213 = scmp.eq.s32.totalorder %s27, 3
      %p214 = por %p212, %p213
      %p216 = scmp.ne.s32.totalorder %s201, %s215
      %p217 = scmp.eq.s32.totalorder %s27, 0
      %p218 = por %p216, %p217
      %s220 = sadd.s32 %s219, 1
      %p223 = scmp.eq.s32.totalorder %s21, 3
      %p224 = scmp.ne.s32.totalorder %s219, %s221
      %p225 = scmp.eq.s32.totalorder %s21, 0
      %p226 = por %p224, %p225
      %p227 = scmp.ne.s32.totalorder %s219, %s221
      %p228 = scmp.eq.s32.totalorder %s26, 3
      %p229 = por %p227, %p228
      %p230 = scmp.ne.s32.totalorder %s221, %s222
      %p231 = scmp.eq.s32.totalorder %s26, 0
      %p232 = por %p230, %p231
      %p233 = scmp.ne.s32.totalorder %s221, %s222
      %p234 = scmp.eq.s32.totalorder %s27, 3
      %p235 = por %p233, %p234
      %p237 = scmp.ne.s32.totalorder %s222, %s236
      %p238 = scmp.eq.s32.totalorder %s27, 0
      %p239 = por %p237, %p238
      %s241 = sadd.s32 %s240, 1
      %p244 = scmp.eq.s32.totalorder %s21, 3
      %p245 = scmp.ne.s32.totalorder %s240, %s242
      %p246 = scmp.eq.s32.totalorder %s21, 0
      %p247 = por %p245, %p246
      %p248 = scmp.ne.s32.totalorder %s240, %s242
      %p249 = scmp.eq.s32.totalorder %s26, 3
      %p250 = por %p248, %p249
      %p251 = scmp.ne.s32.totalorder %s242, %s243
      %p252 = scmp.eq.s32.totalorder %s26, 0
      %p253 = por %p251, %p252
      %p254 = scmp.ne.s32.totalorder %s242, %s243
      %p255 = scmp.eq.s32.totalorder %s27, 3
      %p256 = por %p254, %p255
      %p258 = scmp.ne.s32.totalorder %s243, %s257
      %p259 = scmp.eq.s32.totalorder %s27, 0
      %p260 = por %p258, %p259
      %s261 = ssub.s32 %s29, %s36
      %s262 = ssub.s32 %s28, %s40
      %s263 = sor.u32 %s261, %s262
      %p264 = scmp.eq.s32.totalorder %s263, 0
      %s266 = sadd.s32 %s265, 1
      %s267 = scalar_select %p264, %s265, %s266
      %p270 = pneg %p264
      %p271 = scmp.eq.s32.totalorder %s21, 3
      %p272 = por %p270, %p271
      %p273 = scmp.ne.s32.totalorder %s265, %s268
      %p274 = scmp.eq.s32.totalorder %s21, 0
      %p275 = por %p273, %p274
      %p276 = scmp.ne.s32.totalorder %s265, %s268
      %p277 = scmp.eq.s32.totalorder %s26, 3
      %p278 = por %p276, %p277
      %p279 = scmp.ne.s32.totalorder %s268, %s269
      %p280 = scmp.eq.s32.totalorder %s26, 0
      %p281 = por %p279, %p280
      %p282 = scmp.ne.s32.totalorder %s268, %s269
      %p283 = scmp.eq.s32.totalorder %s27, 3
      %p284 = por %p282, %p283
      %p286 = scmp.ne.s32.totalorder %s269, %s285
      %p287 = scmp.eq.s32.totalorder %s27, 0
      %p288 = por %p286, %p287
      %p289 = scmp.le.s32.totalorder 1, %s21
      %p290 = scmp.lt.s32.totalorder %s21, 5
      %p291 = pnand %p289, %p290
      %p292 = pneg %p291
      // Predicated region
      $region9: #{tpu_custom_call.1} parent=5 // pred_check
        _
      $region10: #{tpu_custom_call.1} parent=5 // pred_check_branch
        %294 = sbr.rel (%p291) target = $region12
      $region11: #{tpu_custom_call.1} parent=5 // pred_region
        %s295 = ssub.s32 %s21, 1
        // Predicated region
        $region13: #{tpu_custom_call.1} parent=11 // pred_check
          %p296 = pneg %p106
        $region14: #{tpu_custom_call.1} parent=11 // pred_check_branch
          %298 = sbr.rel (%p296) target = $region16
        $region15: #{tpu_custom_call.1} parent=11 // pred_region
          %s300 = ssub.s32 2048, 2048
          %301 = vsyncadd [#allocation5], %s300
          %s302 = sshll.u32 [#allocation4], 4
          %s303 = int_to_ptr.vmem [resolvable:$true] %s302
          %308 = dma.hbm_to_vmem [thread:$0]  %s2, 2048, %s303, [#allocation5], 128, 128, 8
        $region16: #{tpu_custom_call.1} parent=11 // pred_fallthru
          _
        // Predicated region
        $region17: #{tpu_custom_call.1} parent=11 // pred_check
          %p309 = pneg %p127
        $region18: #{tpu_custom_call.1} parent=11 // pred_check_branch
          %311 = sbr.rel (%p309) target = $region20
        $region19: #{tpu_custom_call.1} parent=11 // pred_region
          _
        $region20: #{tpu_custom_call.1} parent=11 // pred_fallthru
          _
        // Predicated region
        $region21: #{tpu_custom_call.1} parent=11 // pred_check
          %p312 = pneg %p148
        $region22: #{tpu_custom_call.1} parent=11 // pred_check_branch
          %314 = sbr.rel (%p312) target = $region24
        $region23: #{tpu_custom_call.1} parent=11 // pred_region
          %s316 = ssub.s32 2048, 2048
          %317 = vsyncadd [#allocation5], %s316
          %s318 = sshll.u32 [#allocation6], 4
          %s319 = int_to_ptr.vmem [resolvable:$true] %s318
          %324 = dma.hbm_to_vmem [thread:$0]  %s4, 2048, %s319, [#allocation5], 128, 128, 8
        $region24: #{tpu_custom_call.1} parent=11 // pred_fallthru
          _
        // Predicated region
        $region25: #{tpu_custom_call.1} parent=11 // pred_check
          %p325 = pneg %p169
        $region26: #{tpu_custom_call.1} parent=11 // pred_check_branch
          %327 = sbr.rel (%p325) target = $region28
        $region27: #{tpu_custom_call.1} parent=11 // pred_region
          _
        $region28: #{tpu_custom_call.1} parent=11 // pred_fallthru
          _
        // Predicated region
        $region29: #{tpu_custom_call.1} parent=11 // pred_check
          %p328 = pneg %p190
        $region30: #{tpu_custom_call.1} parent=11 // pred_check_branch
          %330 = sbr.rel (%p328) target = $region32
        $region31: #{tpu_custom_call.1} parent=11 // pred_region
          %s332 = ssub.s32 2048, 2048
          %333 = vsyncadd [#allocation8], %s332
          %s334 = sshll.u32 [#allocation7], 4
          %s335 = int_to_ptr.vmem [resolvable:$true] %s334
          %340 = dma.hbm_to_vmem [thread:$0]  %s6, 2048, %s335, [#allocation8], 128, 128, 8
        $region32: #{tpu_custom_call.1} parent=11 // pred_fallthru
          _
        // Predicated region
        $region33: #{tpu_custom_call.1} parent=11 // pred_check
          %p341 = pneg %p211
        $region34: #{tpu_custom_call.1} parent=11 // pred_check_branch
          %343 = sbr.rel (%p341) target = $region36
        $region35: #{tpu_custom_call.1} parent=11 // pred_region
          _
        $region36: #{tpu_custom_call.1} parent=11 // pred_fallthru
          _
        // Predicated region
        $region37: #{tpu_custom_call.1} parent=11 // pred_check
          %p344 = pneg %p232
        $region38: #{tpu_custom_call.1} parent=11 // pred_check_branch
          %346 = sbr.rel (%p344) target = $region40
        $region39: #{tpu_custom_call.1} parent=11 // pred_region
          _
        $region40: #{tpu_custom_call.1} parent=11 // pred_fallthru
          _
        // Predicated region
        $region41: #{tpu_custom_call.1} parent=11 // pred_check
          %p347 = pneg %p253
        $region42: #{tpu_custom_call.1} parent=11 // pred_check_branch
          %349 = sbr.rel (%p347) target = $region44
        $region43: #{tpu_custom_call.1} parent=11 // pred_region
          _
        $region44: #{tpu_custom_call.1} parent=11 // pred_fallthru
          _
      $region12: #{tpu_custom_call.1} parent=5 // pred_fallthru
        _
      %p350 = scmp.lt.s32.totalorder %s21, 4
      // Predicated region
      $region45: #{tpu_custom_call.1} parent=5 // pred_check
        %p351 = pneg %p350
      $region46: #{tpu_custom_call.1} parent=5 // pred_check_branch
        %353 = sbr.rel (%p351) target = $region48
      $region47: #{tpu_custom_call.1} parent=5 // pred_region
        // Predicated region
        $region49: #{tpu_custom_call.1} parent=47 // pred_check
          %p354 = pneg %p53
        $region50: #{tpu_custom_call.1} parent=47 // pred_check_branch
          %356 = sbr.rel (%p354) target = $region52
        $region51: #{tpu_custom_call.1} parent=47 // pred_region
          %s357 = sand.u32 %s43, 1
          %s358 = scalar_lea.sflag [#allocation3], %s357
          %s359 = sand.u32 %s43, 1
          %s360 = smul.addr %s359, 512
          %s361 = scalar_lea.vmem [#allocation2], %s360
          %s362 = smul.u32 64, %s28
          %s364 = ssub.s32 8192, 8192
          %365 = vsyncadd %s358, %s364
          %s366 = smul.addr %s362, 128
          %s367 = scalar_lea.hbm %s0, %s366
          %s368 = sshll.u32 %s361, 4
          %s369 = int_to_ptr.vmem [resolvable:$true] %s368
          %374 = dma.hbm_to_vmem [thread:$0]  %s367, 8192, %s369, %s358, 128, 128, 8
        $region52: #{tpu_custom_call.1} parent=47 // pred_fallthru
          _
        // Predicated region
        $region53: #{tpu_custom_call.1} parent=47 // pred_check
          %p375 = pneg %p79
        $region54: #{tpu_custom_call.1} parent=47 // pred_check_branch
          %377 = sbr.rel (%p375) target = $region56
        $region55: #{tpu_custom_call.1} parent=47 // pred_region
          %p378 = scmp.lt.s32.totalorder %s29, 1
          %s379 = scalar_select %p378, %s29, 1
          %s380 = scalar_lea.vmem %s1, %s379
        $region56: #{tpu_custom_call.1} parent=47 // pred_fallthru
          _
      $region48: #{tpu_custom_call.1} parent=5 // pred_fallthru
        _
      %p381 = scmp.le.s32.totalorder 1, %s21
      %p382 = scmp.lt.s32.totalorder %s21, 5
      %p383 = pnand %p381, %p382
      %p384 = pneg %p383
      // Predicated region
      $region57: #{tpu_custom_call.1} parent=5 // pred_check
        _
      $region58: #{tpu_custom_call.1} parent=5 // pred_check_branch
        %386 = sbr.rel (%p383) target = $region60
      $region59: #{tpu_custom_call.1} parent=5 // pred_region
        %s387 = ssub.s32 %s21, 1
        %s388 = sand.u32 %s46, 1
        %s389 = scalar_lea.sflag [#allocation3], %s388
        %s390 = sand.u32 %s46, 1
        %s391 = smul.addr %s390, 512
        %s392 = scalar_lea.vmem [#allocation2], %s391
        // Predicated region
        $region61: #{tpu_custom_call.1} parent=59 // pred_check
          %p393 = pneg %p59
        $region62: #{tpu_custom_call.1} parent=59 // pred_check_branch
          %395 = sbr.rel (%p393) target = $region64
        $region63: #{tpu_custom_call.1} parent=59 // pred_region
          %396 = dma.done %s389, 8192
        $region64: #{tpu_custom_call.1} parent=59 // pred_fallthru
          _
        // Predicated region
        $region65: #{tpu_custom_call.1} parent=59 // pred_check
          %p397 = pneg %p106
        $region66: #{tpu_custom_call.1} parent=59 // pred_check_branch
          %399 = sbr.rel (%p397) target = $region68
        $region67: #{tpu_custom_call.1} parent=59 // pred_region
          %400 = dma.done [#allocation5], 2048
        $region68: #{tpu_custom_call.1} parent=59 // pred_fallthru
          _
        // Predicated region
        $region69: #{tpu_custom_call.1} parent=59 // pred_check
          %p401 = pneg %p148
        $region70: #{tpu_custom_call.1} parent=59 // pred_check_branch
          %403 = sbr.rel (%p401) target = $region72
        $region71: #{tpu_custom_call.1} parent=59 // pred_region
          %404 = dma.done [#allocation5], 2048
        $region72: #{tpu_custom_call.1} parent=59 // pred_fallthru
          _
        // Predicated region
        $region73: #{tpu_custom_call.1} parent=59 // pred_check
          %p405 = pneg %p190
        $region74: #{tpu_custom_call.1} parent=59 // pred_check_branch
          %407 = sbr.rel (%p405) target = $region76
        $region75: #{tpu_custom_call.1} parent=59 // pred_region
          %408 = dma.done [#allocation8], 2048
        $region76: #{tpu_custom_call.1} parent=59 // pred_fallthru
          _
        %s409 = sand.u32 %s46, 1
        %s410 = scalar_lea.sflag [#allocation3], %s409
        %s411 = sand.u32 %s46, 1
        %s412 = smul.addr %s411, 512
        %s413 = scalar_lea.vmem [#allocation2], %s412
        %p414 = pneg %p59
        %p415 = pneg %p56
        %p416 = scmp.lt.s32.totalorder %s31, 1
        %s417 = scalar_select %p416, %s31, 1
        %s418 = scalar_lea.vmem %s1, %s417
        %p419 = pneg %p85
        %p420 = pneg %p82
        %p421 = pneg %p106
        %p422 = pneg %p103
        %p423 = pneg %p127
        %p424 = pneg %p124
        %p425 = pneg %p148
        %p426 = pneg %p145
        %p427 = pneg %p169
        %p428 = pneg %p166
        %p429 = pneg %p190
        %p430 = pneg %p187
        %p431 = pneg %p211
        %p432 = pneg %p208
        %p433 = pneg %p232
        %p434 = pneg %p229
        %p435 = pneg %p253
        %p436 = pneg %p250
        %p437 = pneg %p281
        %p438 = pneg %p278
        %s439 = smul.u32 4, %s30
        %p440 = scmp.lt.s32.totalorder %s31, 1
        %s441 = scalar_select %p440, %s31, 1
        %p442 = scmp.lt.s32.totalorder %s439, 7
        %s443 = scalar_select %p442, %s439, 7
        %s444 = smul.addr %s441, 8
        %s445 = sadd.s32 %s443, %s444
        %s446 = smul.addr %s445, 4
        %s447 = scalar_lea.vmem %s10, %s446
        %s448 = smul.u32 64, %s30
        %p449 = scmp.lt.s32.totalorder %s31, 1
        %s450 = scalar_select %p449, %s31, 1
        %s451 = scalar_lea.vmem %s1, %s450
        %s452 = smul.u32 4, %s30
        %p453 = scmp.lt.s32.totalorder %s31, 1
        %s454 = scalar_select %p453, %s31, 1
        %p455 = scmp.lt.s32.totalorder %s452, 7
        %s456 = scalar_select %p455, %s452, 7
        %s457 = smul.addr %s454, 8
        %s458 = sadd.s32 %s456, %s457
        %s459 = smul.addr %s458, 4
        %s460 = scalar_lea.vmem %s10, %s459
        %s461 = smul.u32 4, %s30
        %v462 = vld [vmem:[%s392] sm:$0xff]
        %v463 = vld [vmem:[%s392 + $0x8] sm:$0xff]
        %v464 = vld [vmem:[%s392 + $0x10] sm:$0xff]
        %v465 = vld [vmem:[%s392 + $0x18] sm:$0xff]
        %v466 = vld [vmem:[%s392 + $0x20] sm:$0xff]
        %v467 = vld [vmem:[%s392 + $0x28] sm:$0xff]
        %v468 = vld [vmem:[%s392 + $0x30] sm:$0xff]
        %v469 = vld [vmem:[%s392 + $0x38] sm:$0xff]
        %v470 = vld [vmem:[%s392 + $0x40] sm:$0xff]
        %v471 = vld [vmem:[%s392 + $0x48] sm:$0xff]
        %v472 = vld [vmem:[%s392 + $0x50] sm:$0xff]
        %v473 = vld [vmem:[%s392 + $0x58] sm:$0xff]
        %v474 = vld [vmem:[%s392 + $0x60] sm:$0xff]
        %v475 = vld [vmem:[%s392 + $0x68] sm:$0xff]
        %v476 = vld [vmem:[%s392 + $0x70] sm:$0xff]
        %v477 = vld [vmem:[%s392 + $0x78] sm:$0xff]
        %v478 = vld [vmem:[%s392 + $0x80] sm:$0xff]
        %v479 = vld [vmem:[%s392 + $0x88] sm:$0xff]
        %v480 = vld [vmem:[%s392 + $0x90] sm:$0xff]
        %v481 = vld [vmem:[%s392 + $0x98] sm:$0xff]
        %v482 = vld [vmem:[%s392 + $0xa0] sm:$0xff]
        %v483 = vld [vmem:[%s392 + $0xa8] sm:$0xff]
        %v484 = vld [vmem:[%s392 + $0xb0] sm:$0xff]
        %v485 = vld [vmem:[%s392 + $0xb8] sm:$0xff]
        %v486 = vld [vmem:[%s392 + $0xc0] sm:$0xff]
        %v487 = vld [vmem:[%s392 + $0xc8] sm:$0xff]
        %v488 = vld [vmem:[%s392 + $0xd0] sm:$0xff]
        %v489 = vld [vmem:[%s392 + $0xd8] sm:$0xff]
        %v490 = vld [vmem:[%s392 + $0xe0] sm:$0xff]
        %v491 = vld [vmem:[%s392 + $0xe8] sm:$0xff]
        %v492 = vld [vmem:[%s392 + $0xf0] sm:$0xff]
        %v493 = vld [vmem:[%s392 + $0xf8] sm:$0xff]
        %v494 = vld [vmem:[%s392 + $0x100] sm:$0xff]
        %v495 = vld [vmem:[%s392 + $0x108] sm:$0xff]
        %v496 = vld [vmem:[%s392 + $0x110] sm:$0xff]
        %v497 = vld [vmem:[%s392 + $0x118] sm:$0xff]
        %v498 = vld [vmem:[%s392 + $0x120] sm:$0xff]
        %v499 = vld [vmem:[%s392 + $0x128] sm:$0xff]
        %v500 = vld [vmem:[%s392 + $0x130] sm:$0xff]
        %v501 = vld [vmem:[%s392 + $0x138] sm:$0xff]
        %v502 = vld [vmem:[%s392 + $0x140] sm:$0xff]
        %v503 = vld [vmem:[%s392 + $0x148] sm:$0xff]
        %v504 = vld [vmem:[%s392 + $0x150] sm:$0xff]
        %v505 = vld [vmem:[%s392 + $0x158] sm:$0xff]
        %v506 = vld [vmem:[%s392 + $0x160] sm:$0xff]
        %v507 = vld [vmem:[%s392 + $0x168] sm:$0xff]
        %v508 = vld [vmem:[%s392 + $0x170] sm:$0xff]
        %v509 = vld [vmem:[%s392 + $0x178] sm:$0xff]
        %v510 = vld [vmem:[%s392 + $0x180] sm:$0xff]
        %v511 = vld [vmem:[%s392 + $0x188] sm:$0xff]
        %v512 = vld [vmem:[%s392 + $0x190] sm:$0xff]
        %v513 = vld [vmem:[%s392 + $0x198] sm:$0xff]
        %v514 = vld [vmem:[%s392 + $0x1a0] sm:$0xff]
        %v515 = vld [vmem:[%s392 + $0x1a8] sm:$0xff]
        %v516 = vld [vmem:[%s392 + $0x1b0] sm:$0xff]
        %v517 = vld [vmem:[%s392 + $0x1b8] sm:$0xff]
        %v518 = vld [vmem:[%s392 + $0x1c0] sm:$0xff]
        %v519 = vld [vmem:[%s392 + $0x1c8] sm:$0xff]
        %v520 = vld [vmem:[%s392 + $0x1d0] sm:$0xff]
        %v521 = vld [vmem:[%s392 + $0x1d8] sm:$0xff]
        %v522 = vld [vmem:[%s392 + $0x1e0] sm:$0xff]
        %v523 = vld [vmem:[%s392 + $0x1e8] sm:$0xff]
        %v524 = vld [vmem:[%s392 + $0x1f0] sm:$0xff]
        %v525 = vld [vmem:[%s392 + $0x1f8] sm:$0xff]
        %v526 = vld [vmem:[%s451] sm:$0x1]
        %v528 = vlaneseq
        %v529 = vshrl.u32 %v528, 7
        %v530 = vsub.s32 0, %v529
        %v531 = vrot.slane %v526, %v530
        %v533 = vadd.f32 %v462, %v531
        %v534 = vadd.f32 %v463, %v531
        %v535 = vadd.f32 %v464, %v531
        %v536 = vadd.f32 %v465, %v531
        %v537 = vadd.f32 %v466, %v531
        %v538 = vadd.f32 %v467, %v531
        %v539 = vadd.f32 %v468, %v531
        %v540 = vadd.f32 %v469, %v531
        %v541 = vadd.f32 %v470, %v531
        %v542 = vadd.f32 %v471, %v531
        %v543 = vadd.f32 %v472, %v531
        %v544 = vadd.f32 %v473, %v531
        %v545 = vadd.f32 %v474, %v531
        %v546 = vadd.f32 %v475, %v531
        %v547 = vadd.f32 %v476, %v531
        %v548 = vadd.f32 %v477, %v531
        %v549 = vadd.f32 %v478, %v531
        %v550 = vadd.f32 %v479, %v531
        %v551 = vadd.f32 %v480, %v531
        %v552 = vadd.f32 %v481, %v531
        %v553 = vadd.f32 %v482, %v531
        %v554 = vadd.f32 %v483, %v531
        %v555 = vadd.f32 %v484, %v531
        %v556 = vadd.f32 %v485, %v531
        %v557 = vadd.f32 %v486, %v531
        %v558 = vadd.f32 %v487, %v531
        %v559 = vadd.f32 %v488, %v531
        %v560 = vadd.f32 %v489, %v531
        %v561 = vadd.f32 %v490, %v531
        %v562 = vadd.f32 %v491, %v531
        %v563 = vadd.f32 %v492, %v531
        %v564 = vadd.f32 %v493, %v531
        %v565 = vadd.f32 %v494, %v531
        %v566 = vadd.f32 %v495, %v531
        %v567 = vadd.f32 %v496, %v531
        %v568 = vadd.f32 %v497, %v531
        %v569 = vadd.f32 %v498, %v531
        %v570 = vadd.f32 %v499, %v531
        %v571 = vadd.f32 %v500, %v531
        %v572 = vadd.f32 %v501, %v531
        %v573 = vadd.f32 %v502, %v531
        %v574 = vadd.f32 %v503, %v531
        %v575 = vadd.f32 %v504, %v531
        %v576 = vadd.f32 %v505, %v531
        %v577 = vadd.f32 %v506, %v531
        %v578 = vadd.f32 %v507, %v531
        %v579 = vadd.f32 %v508, %v531
        %v580 = vadd.f32 %v509, %v531
        %v581 = vadd.f32 %v510, %v531
        %v582 = vadd.f32 %v511, %v531
        %v583 = vadd.f32 %v512, %v531
        %v584 = vadd.f32 %v513, %v531
        %v585 = vadd.f32 %v514, %v531
        %v586 = vadd.f32 %v515, %v531
        %v587 = vadd.f32 %v516, %v531
        %v588 = vadd.f32 %v517, %v531
        %v589 = vadd.f32 %v518, %v531
        %v590 = vadd.f32 %v519, %v531
        %v591 = vadd.f32 %v520, %v531
        %v592 = vadd.f32 %v521, %v531
        %v593 = vadd.f32 %v522, %v531
        %v594 = vadd.f32 %v523, %v531
        %v595 = vadd.f32 %v524, %v531
        %v596 = vadd.f32 %v525, %v531
        %v597 = vmax.f32 %v533, 0.0
        %v598 = vmax.f32 %v534, 0.0
        %v599 = vmax.f32 %v535, 0.0
        %v600 = vmax.f32 %v536, 0.0
        %v601 = vmax.f32 %v537, 0.0
        %v602 = vmax.f32 %v538, 0.0
        %v603 = vmax.f32 %v539, 0.0
        %v604 = vmax.f32 %v540, 0.0
        %v605 = vmax.f32 %v541, 0.0
        %v606 = vmax.f32 %v542, 0.0
        %v607 = vmax.f32 %v543, 0.0
        %v608 = vmax.f32 %v544, 0.0
        %v609 = vmax.f32 %v545, 0.0
        %v610 = vmax.f32 %v546, 0.0
        %v611 = vmax.f32 %v547, 0.0
        %v612 = vmax.f32 %v548, 0.0
        %v613 = vmax.f32 %v549, 0.0
        %v614 = vmax.f32 %v550, 0.0
        %v615 = vmax.f32 %v551, 0.0
        %v616 = vmax.f32 %v552, 0.0
        %v617 = vmax.f32 %v553, 0.0
        %v618 = vmax.f32 %v554, 0.0
        %v619 = vmax.f32 %v555, 0.0
        %v620 = vmax.f32 %v556, 0.0
        %v621 = vmax.f32 %v557, 0.0
        %v622 = vmax.f32 %v558, 0.0
        %v623 = vmax.f32 %v559, 0.0
        %v624 = vmax.f32 %v560, 0.0
        %v625 = vmax.f32 %v561, 0.0
        %v626 = vmax.f32 %v562, 0.0
        %v627 = vmax.f32 %v563, 0.0
        %v628 = vmax.f32 %v564, 0.0
        %v629 = vmax.f32 %v565, 0.0
        %v630 = vmax.f32 %v566, 0.0
        %v631 = vmax.f32 %v567, 0.0
        %v632 = vmax.f32 %v568, 0.0
        %v633 = vmax.f32 %v569, 0.0
        %v634 = vmax.f32 %v570, 0.0
        %v635 = vmax.f32 %v571, 0.0
        %v636 = vmax.f32 %v572, 0.0
        %v637 = vmax.f32 %v573, 0.0
        %v638 = vmax.f32 %v574, 0.0
        %v639 = vmax.f32 %v575, 0.0
        %v640 = vmax.f32 %v576, 0.0
        %v641 = vmax.f32 %v577, 0.0
        %v642 = vmax.f32 %v578, 0.0
        %v643 = vmax.f32 %v579, 0.0
        %v644 = vmax.f32 %v580, 0.0
        %v645 = vmax.f32 %v581, 0.0
        %v646 = vmax.f32 %v582, 0.0
        %v647 = vmax.f32 %v583, 0.0
        %v648 = vmax.f32 %v584, 0.0
        %v649 = vmax.f32 %v585, 0.0
        %v650 = vmax.f32 %v586, 0.0
        %v651 = vmax.f32 %v587, 0.0
        %v652 = vmax.f32 %v588, 0.0
        %v653 = vmax.f32 %v589, 0.0
        %v654 = vmax.f32 %v590, 0.0
        %v655 = vmax.f32 %v591, 0.0
        %v656 = vmax.f32 %v592, 0.0
        %v657 = vmax.f32 %v593, 0.0
        %v658 = vmax.f32 %v594, 0.0
        %v659 = vmax.f32 %v595, 0.0
        %v660 = vmax.f32 %v596, 0.0
        %v661 = vld [vmem:[#allocation4] sm:$0xff]
        %v662 = vld [vmem:[#allocation4 + $0x8] sm:$0xff]
        %v663 = vld [vmem:[#allocation4 + $0x10] sm:$0xff]
        %v664 = vld [vmem:[#allocation4 + $0x18] sm:$0xff]
        %v665 = vld [vmem:[#allocation4 + $0x20] sm:$0xff]
        %v666 = vld [vmem:[#allocation4 + $0x28] sm:$0xff]
        %v667 = vld [vmem:[#allocation4 + $0x30] sm:$0xff]
        %v668 = vld [vmem:[#allocation4 + $0x38] sm:$0xff]
        %v669 = vld [vmem:[#allocation4 + $0x40] sm:$0xff]
        %v670 = vld [vmem:[#allocation4 + $0x48] sm:$0xff]
        %v671 = vld [vmem:[#allocation4 + $0x50] sm:$0xff]
        %v672 = vld [vmem:[#allocation4 + $0x58] sm:$0xff]
        %v673 = vld [vmem:[#allocation4 + $0x60] sm:$0xff]
        %v674 = vld [vmem:[#allocation4 + $0x68] sm:$0xff]
        %v675 = vld [vmem:[#allocation4 + $0x70] sm:$0xff]
        %v676 = vld [vmem:[#allocation4 + $0x78] sm:$0xff]
        %v677 = vld [vmem:[%s3] sm:$0x1]
        %v679 = vlaneseq
        %v680 = vshrl.u32 %v679, 7
        %v681 = vsub.s32 0, %v680
        %v682 = vrot.slane %v677, %v681
        %684 = vmatprep.subr.mxu0 0.0
        %685 = vmatpush1.msra.mxu0 %v661
        %686 = vmatprep.subr.mxu0 0.0
        %687 = vmatpush1.msra.mxu0 %v662
        %688 = vmatprep.subr.mxu0 0.0
        %689 = vmatpush1.msra.mxu0 %v663
        %690 = vmatprep.subr.mxu0 0.0
        %691 = vmatpush1.msra.mxu0 %v664
        %692 = vmatprep.subr.mxu0 0.0
        %693 = vmatpush1.msra.mxu0 %v665
        %694 = vmatprep.subr.mxu0 0.0
        %695 = vmatpush1.msra.mxu0 %v666
        %696 = vmatprep.subr.mxu0 0.0
        %697 = vmatpush1.msra.mxu0 %v667
        %698 = vmatprep.subr.mxu0 0.0
        %699 = vmatpush1.msra.mxu0 %v668
        %700 = vmatprep.subr.mxu0 0.0
        %701 = vmatpush1.msra.mxu0 %v669
        %702 = vmatprep.subr.mxu0 0.0
        %703 = vmatpush1.msra.mxu0 %v670
        %704 = vmatprep.subr.mxu0 0.0
        %705 = vmatpush1.msra.mxu0 %v671
        %706 = vmatprep.subr.mxu0 0.0
        %707 = vmatpush1.msra.mxu0 %v672
        %708 = vmatprep.subr.mxu0 0.0
        %709 = vmatpush1.msra.mxu0 %v673
        %710 = vmatprep.subr.mxu0 0.0
        %711 = vmatpush1.msra.mxu0 %v674
        %712 = vmatprep.subr.mxu0 0.0
        %713 = vmatpush1.msra.mxu0 %v675
        %714 = vmatprep.subr.mxu0 0.0
        %715 = vmatpush1.msra.mxu0 %v676
        %716 = vmatprep.subr.mxu0 0.0
        %717 = vmatpush1.msra.mxu0 0.0
        %718 = vmatprep.subr.mxu0 0.0
        %719 = vmatpush1.msra.mxu0 0.0
        %720 = vmatprep.subr.mxu0 0.0
        %721 = vmatpush1.msra.mxu0 0.0
        %722 = vmatprep.subr.mxu0 0.0
        %723 = vmatpush1.msra.mxu0 0.0
        %724 = vmatprep.subr.mxu0 0.0
        %725 = vmatpush1.msra.mxu0 0.0
        %726 = vmatprep.subr.mxu0 0.0
        %727 = vmatpush1.msra.mxu0 0.0
        %728 = vmatprep.subr.mxu0 0.0
        %729 = vmatpush1.msra.mxu0 0.0
        %730 = vmatprep.subr.mxu0 0.0
        %731 = vmatpush1.msra.mxu0 0.0
        %732 = vmatprep.subr.mxu0 0.0
        %733 = vmatpush1.msra.mxu0 0.0
        %734 = vmatprep.subr.mxu0 0.0
        %735 = vmatpush1.msra.mxu0 0.0
        %736 = vmatprep.subr.mxu0 0.0
        %737 = vmatpush1.msra.mxu0 0.0
        %738 = vmatprep.subr.mxu0 0.0
        %739 = vmatpush1.msra.mxu0 0.0
        %740 = vmatprep.subr.mxu0 0.0
        %741 = vmatpush1.msra.mxu0 0.0
        %742 = vmatprep.subr.mxu0 0.0
        %743 = vmatpush1.msra.mxu0 0.0
        %744 = vmatprep.subr.mxu0 0.0
        %745 = vmatpush1.msra.mxu0 0.0
        %746 = vmatprep.subr.mxu0 0.0
        %747 = vmatpush1.msra.mxu0 0.0
        %748 = vmatprep.mubr.f32.mxu0 0.0
        %749 = vmatmul.mubr.f32.gmra.mrb[0].mxu0 %v597
        %v750 = vpop.f32.mrb[0].mxu0
        %v751 = vadd.f32 %v682, %v750
        %v752 = vpop.f32.mrb[0].mxu0
        %753 = vmatprep.mubr.f32.mxu0 0.0
        %754 = vmatmul.mubr.f32.gmra.mrb[0].mxu0 %v598
        %v755 = vpop.f32.mrb[0].mxu0
        %v756 = vadd.f32 %v682, %v755
        %v757 = vpop.f32.mrb[0].mxu0
        %758 = vmatprep.mubr.f32.mxu0 0.0
        %759 = vmatmul.mubr.f32.gmra.mrb[0].mxu0 %v599
        %v760 = vpop.f32.mrb[0].mxu0
        %v761 = vadd.f32 %v682, %v760
        %v762 = vpop.f32.mrb[0].mxu0
        %763 = vmatprep.mubr.f32.mxu0 0.0
        %764 = vmatmul.mubr.f32.gmra.mrb[0].mxu0 %v600
        %v765 = vpop.f32.mrb[0].mxu0
        %v766 = vadd.f32 %v682, %v765
        %v767 = vpop.f32.mrb[0].mxu0
        %768 = vmatprep.mubr.f32.mxu0 0.0
        %769 = vmatmul.mubr.f32.gmra.mrb[0].mxu0 %v601
        %v770 = vpop.f32.mrb[0].mxu0
        %v771 = vadd.f32 %v682, %v770
        %v772 = vpop.f32.mrb[0].mxu0
        %773 = vmatprep.mubr.f32.mxu0 0.0
        %774 = vmatmul.mubr.f32.gmra.mrb[0].mxu0 %v602
        %v775 = vpop.f32.mrb[0].mxu0
        %v776 = vadd.f32 %v682, %v775
        %v777 = vpop.f32.mrb[0].mxu0
        %778 = vmatprep.mubr.f32.mxu0 0.0
        %779 = vmatmul.mubr.f32.gmra.mrb[0].mxu0 %v603
        %v780 = vpop.f32.mrb[0].mxu0
        %v781 = vadd.f32 %v682, %v780
        %v782 = vpop.f32.mrb[0].mxu0
        %783 = vmatprep.mubr.f32.mxu0 0.0
        %784 = vmatmul.mubr.f32.gmra.mrb[0].mxu0 %v604
        %v785 = vpop.f32.mrb[0].mxu0
        %v786 = vadd.f32 %v682, %v785
        %v787 = vpop.f32.mrb[0].mxu0
        %788 = vmatprep.mubr.f32.mxu0 0.0
        %789 = vmatmul.mubr.f32.gmra.mrb[0].mxu0 %v605
        %v790 = vpop.f32.mrb[0].mxu0
        %v791 = vadd.f32 %v682, %v790
        %v792 = vpop.f32.mrb[0].mxu0
        %793 = vmatprep.mubr.f32.mxu0 0.0
        %794 = vmatmul.mubr.f32.gmra.mrb[0].mxu0 %v606
        %v795 = vpop.f32.mrb[0].mxu0
        %v796 = vadd.f32 %v682, %v795
        %v797 = vpop.f32.mrb[0].mxu0
        %798 = vmatprep.mubr.f32.mxu0 0.0
        %799 = vmatmul.mubr.f32.gmra.mrb[0].mxu0 %v607
        %v800 = vpop.f32.mrb[0].mxu0
        %v801 = vadd.f32 %v682, %v800
        %v802 = vpop.f32.mrb[0].mxu0
        %803 = vmatprep.mubr.f32.mxu0 0.0
        %804 = vmatmul.mubr.f32.gmra.mrb[0].mxu0 %v608
        %v805 = vpop.f32.mrb[0].mxu0
        %v806 = vadd.f32 %v682, %v805
        %v807 = vpop.f32.mrb[0].mxu0
        %808 = vmatprep.mubr.f32.mxu0 0.0
        %809 = vmatmul.mubr.f32.gmra.mrb[0].mxu0 %v609
        %v810 = vpop.f32.mrb[0].mxu0
        %v811 = vadd.f32 %v682, %v810
        %v812 = vpop.f32.mrb[0].mxu0
        %813 = vmatprep.mubr.f32.mxu0 0.0
        %814 = vmatmul.mubr.f32.gmra.mrb[0].mxu0 %v610
        %v815 = vpop.f32.mrb[0].mxu0
        %v816 = vadd.f32 %v682, %v815
        %v817 = vpop.f32.mrb[0].mxu0
        %818 = vmatprep.mubr.f32.mxu0 0.0
        %819 = vmatmul.mubr.f32.gmra.mrb[0].mxu0 %v611
        %v820 = vpop.f32.mrb[0].mxu0
        %v821 = vadd.f32 %v682, %v820
        %v822 = vpop.f32.mrb[0].mxu0
        %823 = vmatprep.mubr.f32.mxu0 0.0
        %824 = vmatmul.mubr.f32.gmra.mrb[0].mxu0 %v612
        %v825 = vpop.f32.mrb[0].mxu0
        %v826 = vadd.f32 %v682, %v825
        %v827 = vpop.f32.mrb[0].mxu0
        %828 = vmatprep.mubr.f32.mxu0 0.0
        %829 = vmatmul.mubr.f32.gmra.mrb[0].mxu0 %v613
        %v830 = vpop.f32.mrb[0].mxu0
        %v831 = vadd.f32 %v682, %v830
        %v832 = vpop.f32.mrb[0].mxu0
        %833 = vmatprep.mubr.f32.mxu0 0.0
        %834 = vmatmul.mubr.f32.gmra.mrb[0].mxu0 %v614
        %v835 = vpop.f32.mrb[0].mxu0
        %v836 = vadd.f32 %v682, %v835
        %v837 = vpop.f32.mrb[0].mxu0
        %838 = vmatprep.mubr.f32.mxu0 0.0
        %839 = vmatmul.mubr.f32.gmra.mrb[0].mxu0 %v615
        %v840 = vpop.f32.mrb[0].mxu0
        %v841 = vadd.f32 %v682, %v840
        %v842 = vpop.f32.mrb[0].mxu0
        %843 = vmatprep.mubr.f32.mxu0 0.0
        %844 = vmatmul.mubr.f32.gmra.mrb[0].mxu0 %v616
        %v845 = vpop.f32.mrb[0].mxu0
        %v846 = vadd.f32 %v682, %v845
        %v847 = vpop.f32.mrb[0].mxu0
        %848 = vmatprep.mubr.f32.mxu0 0.0
        %849 = vmatmul.mubr.f32.gmra.mrb[0].mxu0 %v617
        %v850 = vpop.f32.mrb[0].mxu0
        %v851 = vadd.f32 %v682, %v850
        %v852 = vpop.f32.mrb[0].mxu0
        %853 = vmatprep.mubr.f32.mxu0 0.0
        %854 = vmatmul.mubr.f32.gmra.mrb[0].mxu0 %v618
        %v855 = vpop.f32.mrb[0].mxu0
        %v856 = vadd.f32 %v682, %v855
        %v857 = vpop.f32.mrb[0].mxu0
        %858 = vmatprep.mubr.f32.mxu0 0.0
        %859 = vmatmul.mubr.f32.gmra.mrb[0].mxu0 %v619
        %v860 = vpop.f32.mrb[0].mxu0
        %v861 = vadd.f32 %v682, %v860
        %v862 = vpop.f32.mrb[0].mxu0
        %863 = vmatprep.mubr.f32.mxu0 0.0
        %864 = vmatmul.mubr.f32.gmra.mrb[0].mxu0 %v620
        %v865 = vpop.f32.mrb[0].mxu0
        %v866 = vadd.f32 %v682, %v865
        %v867 = vpop.f32.mrb[0].mxu0
        %868 = vmatprep.mubr.f32.mxu0 0.0
        %869 = vmatmul.mubr.f32.gmra.mrb[0].mxu0 %v621
        %v870 = vpop.f32.mrb[0].mxu0
        %v871 = vadd.f32 %v682, %v870
        %v872 = vpop.f32.mrb[0].mxu0
        %873 = vmatprep.mubr.f32.mxu0 0.0
        %874 = vmatmul.mubr.f32.gmra.mrb[0].mxu0 %v622
        %v875 = vpop.f32.mrb[0].mxu0
        %v876 = vadd.f32 %v682, %v875
        %v877 = vpop.f32.mrb[0].mxu0
        %878 = vmatprep.mubr.f32.mxu0 0.0
        %879 = vmatmul.mubr.f32.gmra.mrb[0].mxu0 %v623
        %v880 = vpop.f32.mrb[0].mxu0
        %v881 = vadd.f32 %v682, %v880
        %v882 = vpop.f32.mrb[0].mxu0
        %883 = vmatprep.mubr.f32.mxu0 0.0
        %884 = vmatmul.mubr.f32.gmra.mrb[0].mxu0 %v624
        %v885 = vpop.f32.mrb[0].mxu0
        %v886 = vadd.f32 %v682, %v885
        %v887 = vpop.f32.mrb[0].mxu0
        %888 = vmatprep.mubr.f32.mxu0 0.0
        %889 = vmatmul.mubr.f32.gmra.mrb[0].mxu0 %v625
        %v890 = vpop.f32.mrb[0].mxu0
        %v891 = vadd.f32 %v682, %v890
        %v892 = vpop.f32.mrb[0].mxu0
        %893 = vmatprep.mubr.f32.mxu0 0.0
        %894 = vmatmul.mubr.f32.gmra.mrb[0].mxu0 %v626
        %v895 = vpop.f32.mrb[0].mxu0
        %v896 = vadd.f32 %v682, %v895
        %v897 = vpop.f32.mrb[0].mxu0
        %898 = vmatprep.mubr.f32.mxu0 0.0
        %899 = vmatmul.mubr.f32.gmra.mrb[0].mxu0 %v627
        %v900 = vpop.f32.mrb[0].mxu0
        %v901 = vadd.f32 %v682, %v900
        %v902 = vpop.f32.mrb[0].mxu0
        %903 = vmatprep.mubr.f32.mxu0 0.0
        %904 = vmatmul.mubr.f32.gmra.mrb[0].mxu0 %v628
        %v905 = vpop.f32.mrb[0].mxu0
        %v906 = vadd.f32 %v682, %v905
        %v907 = vpop.f32.mrb[0].mxu0
        %908 = vmatprep.mubr.f32.mxu0 0.0
        %909 = vmatmul.mubr.f32.gmra.mrb[0].mxu0 %v629
        %v910 = vpop.f32.mrb[0].mxu0
        %v911 = vadd.f32 %v682, %v910
        %v912 = vpop.f32.mrb[0].mxu0
        %913 = vmatprep.mubr.f32.mxu0 0.0
        %914 = vmatmul.mubr.f32.gmra.mrb[0].mxu0 %v630
        %v915 = vpop.f32.mrb[0].mxu0
        %v916 = vadd.f32 %v682, %v915
        %v917 = vpop.f32.mrb[0].mxu0
        %918 = vmatprep.mubr.f32.mxu0 0.0
        %919 = vmatmul.mubr.f32.gmra.mrb[0].mxu0 %v631
        %v920 = vpop.f32.mrb[0].mxu0
        %v921 = vadd.f32 %v682, %v920
        %v922 = vpop.f32.mrb[0].mxu0
        %923 = vmatprep.mubr.f32.mxu0 0.0
        %924 = vmatmul.mubr.f32.gmra.mrb[0].mxu0 %v632
        %v925 = vpop.f32.mrb[0].mxu0
        %v926 = vadd.f32 %v682, %v925
        %v927 = vpop.f32.mrb[0].mxu0
        %928 = vmatprep.mubr.f32.mxu0 0.0
        %929 = vmatmul.mubr.f32.gmra.mrb[0].mxu0 %v633
        %v930 = vpop.f32.mrb[0].mxu0
        %v931 = vadd.f32 %v682, %v930
        %v932 = vpop.f32.mrb[0].mxu0
        %933 = vmatprep.mubr.f32.mxu0 0.0
        %934 = vmatmul.mubr.f32.gmra.mrb[0].mxu0 %v634
        %v935 = vpop.f32.mrb[0].mxu0
        %v936 = vadd.f32 %v682, %v935
        %v937 = vpop.f32.mrb[0].mxu0
        %938 = vmatprep.mubr.f32.mxu0 0.0
        %939 = vmatmul.mubr.f32.gmra.mrb[0].mxu0 %v635
        %v940 = vpop.f32.mrb[0].mxu0
        %v941 = vadd.f32 %v682, %v940
        %v942 = vpop.f32.mrb[0].mxu0
        %943 = vmatprep.mubr.f32.mxu0 0.0
        %944 = vmatmul.mubr.f32.gmra.mrb[0].mxu0 %v636
        %v945 = vpop.f32.mrb[0].mxu0
        %v946 = vadd.f32 %v682, %v945
        %v947 = vpop.f32.mrb[0].mxu0
        %948 = vmatprep.mubr.f32.mxu0 0.0
        %949 = vmatmul.mubr.f32.gmra.mrb[0].mxu0 %v637
        %v950 = vpop.f32.mrb[0].mxu0
        %v951 = vadd.f32 %v682, %v950
        %v952 = vpop.f32.mrb[0].mxu0
        %953 = vmatprep.mubr.f32.mxu0 0.0
        %954 = vmatmul.mubr.f32.gmra.mrb[0].mxu0 %v638
        %v955 = vpop.f32.mrb[0].mxu0
        %v956 = vadd.f32 %v682, %v955
        %v957 = vpop.f32.mrb[0].mxu0
        %958 = vmatprep.mubr.f32.mxu0 0.0
        %959 = vmatmul.mubr.f32.gmra.mrb[0].mxu0 %v639
        %v960 = vpop.f32.mrb[0].mxu0
        %v961 = vadd.f32 %v682, %v960
        %v962 = vpop.f32.mrb[0].mxu0
        %963 = vmatprep.mubr.f32.mxu0 0.0
        %964 = vmatmul.mubr.f32.gmra.mrb[0].mxu0 %v640
        %v965 = vpop.f32.mrb[0].mxu0
        %v966 = vadd.f32 %v682, %v965
        %v967 = vpop.f32.mrb[0].mxu0
        %968 = vmatprep.mubr.f32.mxu0 0.0
        %969 = vmatmul.mubr.f32.gmra.mrb[0].mxu0 %v641
        %v970 = vpop.f32.mrb[0].mxu0
        %v971 = vadd.f32 %v682, %v970
        %v972 = vpop.f32.mrb[0].mxu0
        %973 = vmatprep.mubr.f32.mxu0 0.0
        %974 = vmatmul.mubr.f32.gmra.mrb[0].mxu0 %v642
        %v975 = vpop.f32.mrb[0].mxu0
        %v976 = vadd.f32 %v682, %v975
        %v977 = vpop.f32.mrb[0].mxu0
        %978 = vmatprep.mubr.f32.mxu0 0.0
        %979 = vmatmul.mubr.f32.gmra.mrb[0].mxu0 %v643
        %v980 = vpop.f32.mrb[0].mxu0
        %v981 = vadd.f32 %v682, %v980
        %v982 = vpop.f32.mrb[0].mxu0
        %983 = vmatprep.mubr.f32.mxu0 0.0
        %984 = vmatmul.mubr.f32.gmra.mrb[0].mxu0 %v644
        %v985 = vpop.f32.mrb[0].mxu0
        %v986 = vadd.f32 %v682, %v985
        %v987 = vpop.f32.mrb[0].mxu0
        %988 = vmatprep.mubr.f32.mxu0 0.0
        %989 = vmatmul.mubr.f32.gmra.mrb[0].mxu0 %v645
        %v990 = vpop.f32.mrb[0].mxu0
        %v991 = vadd.f32 %v682, %v990
        %v992 = vpop.f32.mrb[0].mxu0
        %993 = vmatprep.mubr.f32.mxu0 0.0
        %994 = vmatmul.mubr.f32.gmra.mrb[0].mxu0 %v646
        %v995 = vpop.f32.mrb[0].mxu0
        %v996 = vadd.f32 %v682, %v995
        %v997 = vpop.f32.mrb[0].mxu0
        %998 = vmatprep.mubr.f32.mxu0 0.0
        %999 = vmatmul.mubr.f32.gmra.mrb[0].mxu0 %v647
        %v1000 = vpop.f32.mrb[0].mxu0
        %v1001 = vadd.f32 %v682, %v1000
        %v1002 = vpop.f32.mrb[0].mxu0
        %1003 = vmatprep.mubr.f32.mxu0 0.0
        %1004 = vmatmul.mubr.f32.gmra.mrb[0].mxu0 %v648
        %v1005 = vpop.f32.mrb[0].mxu0
        %v1006 = vadd.f32 %v682, %v1005
        %v1007 = vpop.f32.mrb[0].mxu0
        %1008 = vmatprep.mubr.f32.mxu0 0.0
        %1009 = vmatmul.mubr.f32.gmra.mrb[0].mxu0 %v649
        %v1010 = vpop.f32.mrb[0].mxu0
        %v1011 = vadd.f32 %v682, %v1010
        %v1012 = vpop.f32.mrb[0].mxu0
        %1013 = vmatprep.mubr.f32.mxu0 0.0
        %1014 = vmatmul.mubr.f32.gmra.mrb[0].mxu0 %v650
        %v1015 = vpop.f32.mrb[0].mxu0
        %v1016 = vadd.f32 %v682, %v1015
        %v1017 = vpop.f32.mrb[0].mxu0
        %1018 = vmatprep.mubr.f32.mxu0 0.0
        %1019 = vmatmul.mubr.f32.gmra.mrb[0].mxu0 %v651
        %v1020 = vpop.f32.mrb[0].mxu0
        %v1021 = vadd.f32 %v682, %v1020
        %v1022 = vpop.f32.mrb[0].mxu0
        %1023 = vmatprep.mubr.f32.mxu0 0.0
        %1024 = vmatmul.mubr.f32.gmra.mrb[0].mxu0 %v652
        %v1025 = vpop.f32.mrb[0].mxu0
        %v1026 = vadd.f32 %v682, %v1025
        %v1027 = vpop.f32.mrb[0].mxu0
        %1028 = vmatprep.mubr.f32.mxu0 0.0
        %1029 = vmatmul.mubr.f32.gmra.mrb[0].mxu0 %v653
        %v1030 = vpop.f32.mrb[0].mxu0
        %v1031 = vadd.f32 %v682, %v1030
        %v1032 = vpop.f32.mrb[0].mxu0
        %1033 = vmatprep.mubr.f32.mxu0 0.0
        %1034 = vmatmul.mubr.f32.gmra.mrb[0].mxu0 %v654
        %v1035 = vpop.f32.mrb[0].mxu0
        %v1036 = vadd.f32 %v682, %v1035
        %v1037 = vpop.f32.mrb[0].mxu0
        %1038 = vmatprep.mubr.f32.mxu0 0.0
        %1039 = vmatmul.mubr.f32.gmra.mrb[0].mxu0 %v655
        %v1040 = vpop.f32.mrb[0].mxu0
        %v1041 = vadd.f32 %v682, %v1040
        %v1042 = vpop.f32.mrb[0].mxu0
        %1043 = vmatprep.mubr.f32.mxu0 0.0
        %1044 = vmatmul.mubr.f32.gmra.mrb[0].mxu0 %v656
        %v1045 = vpop.f32.mrb[0].mxu0
        %v1046 = vadd.f32 %v682, %v1045
        %v1047 = vpop.f32.mrb[0].mxu0
        %1048 = vmatprep.mubr.f32.mxu0 0.0
        %1049 = vmatmul.mubr.f32.gmra.mrb[0].mxu0 %v657
        %v1050 = vpop.f32.mrb[0].mxu0
        %v1051 = vadd.f32 %v682, %v1050
        %v1052 = vpop.f32.mrb[0].mxu0
        %1053 = vmatprep.mubr.f32.mxu0 0.0
        %1054 = vmatmul.mubr.f32.gmra.mrb[0].mxu0 %v658
        %v1055 = vpop.f32.mrb[0].mxu0
        %v1056 = vadd.f32 %v682, %v1055
        %v1057 = vpop.f32.mrb[0].mxu0
        %1058 = vmatprep.mubr.f32.mxu0 0.0
        %1059 = vmatmul.mubr.f32.gmra.mrb[0].mxu0 %v659
        %v1060 = vpop.f32.mrb[0].mxu0
        %v1061 = vadd.f32 %v682, %v1060
        %v1062 = vpop.f32.mrb[0].mxu0
        %1063 = vmatprep.mubr.f32.mxu0 0.0
        %1064 = vmatmul.mubr.f32.gmra.mrb[0].mxu0 %v660
        %v1065 = vpop.f32.mrb[0].mxu0
        %v1066 = vadd.f32 %v682, %v1065
        %v1067 = vpop.f32.mrb[0].mxu0
        %1068 = vdwg.mxu0
        %v1069 = vmax.f32 %v751, 0.0
        %v1070 = vmax.f32 %v756, 0.0
        %v1071 = vmax.f32 %v761, 0.0
        %v1072 = vmax.f32 %v766, 0.0
        %v1073 = vmax.f32 %v771, 0.0
        %v1074 = vmax.f32 %v776, 0.0
        %v1075 = vmax.f32 %v781, 0.0
        %v1076 = vmax.f32 %v786, 0.0
        %v1077 = vmax.f32 %v791, 0.0
        %v1078 = vmax.f32 %v796, 0.0
        %v1079 = vmax.f32 %v801, 0.0
        %v1080 = vmax.f32 %v806, 0.0
        %v1081 = vmax.f32 %v811, 0.0
        %v1082 = vmax.f32 %v816, 0.0
        %v1083 = vmax.f32 %v821, 0.0
        %v1084 = vmax.f32 %v826, 0.0
        %v1085 = vmax.f32 %v831, 0.0
        %v1086 = vmax.f32 %v836, 0.0
        %v1087 = vmax.f32 %v841, 0.0
        %v1088 = vmax.f32 %v846, 0.0
        %v1089 = vmax.f32 %v851, 0.0
        %v1090 = vmax.f32 %v856, 0.0
        %v1091 = vmax.f32 %v861, 0.0
        %v1092 = vmax.f32 %v866, 0.0
        %v1093 = vmax.f32 %v871, 0.0
        %v1094 = vmax.f32 %v876, 0.0
        %v1095 = vmax.f32 %v881, 0.0
        %v1096 = vmax.f32 %v886, 0.0
        %v1097 = vmax.f32 %v891, 0.0
        %v1098 = vmax.f32 %v896, 0.0
        %v1099 = vmax.f32 %v901, 0.0
        %v1100 = vmax.f32 %v906, 0.0
        %v1101 = vmax.f32 %v911, 0.0
        %v1102 = vmax.f32 %v916, 0.0
        %v1103 = vmax.f32 %v921, 0.0
        %v1104 = vmax.f32 %v926, 0.0
        %v1105 = vmax.f32 %v931, 0.0
        %v1106 = vmax.f32 %v936, 0.0
        %v1107 = vmax.f32 %v941, 0.0
        %v1108 = vmax.f32 %v946, 0.0
        %v1109 = vmax.f32 %v951, 0.0
        %v1110 = vmax.f32 %v956, 0.0
        %v1111 = vmax.f32 %v961, 0.0
        %v1112 = vmax.f32 %v966, 0.0
        %v1113 = vmax.f32 %v971, 0.0
        %v1114 = vmax.f32 %v976, 0.0
        %v1115 = vmax.f32 %v981, 0.0
        %v1116 = vmax.f32 %v986, 0.0
        %v1117 = vmax.f32 %v991, 0.0
        %v1118 = vmax.f32 %v996, 0.0
        %v1119 = vmax.f32 %v1001, 0.0
        %v1120 = vmax.f32 %v1006, 0.0
        %v1121 = vmax.f32 %v1011, 0.0
        %v1122 = vmax.f32 %v1016, 0.0
        %v1123 = vmax.f32 %v1021, 0.0
        %v1124 = vmax.f32 %v1026, 0.0
        %v1125 = vmax.f32 %v1031, 0.0
        %v1126 = vmax.f32 %v1036, 0.0
        %v1127 = vmax.f32 %v1041, 0.0
        %v1128 = vmax.f32 %v1046, 0.0
        %v1129 = vmax.f32 %v1051, 0.0
        %v1130 = vmax.f32 %v1056, 0.0
        %v1131 = vmax.f32 %v1061, 0.0
        %v1132 = vmax.f32 %v1066, 0.0
        %v1133 = vld [vmem:[#allocation6] sm:$0xff]
        %v1134 = vld [vmem:[#allocation6 + $0x8] sm:$0xff]
        %v1135 = vld [vmem:[#allocation6 + $0x10] sm:$0xff]
        %v1136 = vld [vmem:[#allocation6 + $0x18] sm:$0xff]
        %v1137 = vld [vmem:[#allocation6 + $0x20] sm:$0xff]
        %v1138 = vld [vmem:[#allocation6 + $0x28] sm:$0xff]
        %v1139 = vld [vmem:[#allocation6 + $0x30] sm:$0xff]
        %v1140 = vld [vmem:[#allocation6 + $0x38] sm:$0xff]
        %v1141 = vld [vmem:[#allocation6 + $0x40] sm:$0xff]
        %v1142 = vld [vmem:[#allocation6 + $0x48] sm:$0xff]
        %v1143 = vld [vmem:[#allocation6 + $0x50] sm:$0xff]
        %v1144 = vld [vmem:[#allocation6 + $0x58] sm:$0xff]
        %v1145 = vld [vmem:[#allocation6 + $0x60] sm:$0xff]
        %v1146 = vld [vmem:[#allocation6 + $0x68] sm:$0xff]
        %v1147 = vld [vmem:[#allocation6 + $0x70] sm:$0xff]
        %v1148 = vld [vmem:[#allocation6 + $0x78] sm:$0xff]
        %v1149 = vld [vmem:[%s5] sm:$0x1]
        %v1151 = vlaneseq
        %v1152 = vshrl.u32 %v1151, 7
        %v1153 = vsub.s32 0, %v1152
        %v1154 = vrot.slane %v1149, %v1153
        %1156 = vmatprep.subr.mxu0 0.0
        %1157 = vmatpush1.msra.mxu0 %v1133
        %1158 = vmatprep.subr.mxu0 0.0
        %1159 = vmatpush1.msra.mxu0 %v1134
        %1160 = vmatprep.subr.mxu0 0.0
        %1161 = vmatpush1.msra.mxu0 %v1135
        %1162 = vmatprep.subr.mxu0 0.0
        %1163 = vmatpush1.msra.mxu0 %v1136
        %1164 = vmatprep.subr.mxu0 0.0
        %1165 = vmatpush1.msra.mxu0 %v1137
        %1166 = vmatprep.subr.mxu0 0.0
        %1167 = vmatpush1.msra.mxu0 %v1138
        %1168 = vmatprep.subr.mxu0 0.0
        %1169 = vmatpush1.msra.mxu0 %v1139
        %1170 = vmatprep.subr.mxu0 0.0
        %1171 = vmatpush1.msra.mxu0 %v1140
        %1172 = vmatprep.subr.mxu0 0.0
        %1173 = vmatpush1.msra.mxu0 %v1141
        %1174 = vmatprep.subr.mxu0 0.0
        %1175 = vmatpush1.msra.mxu0 %v1142
        %1176 = vmatprep.subr.mxu0 0.0
        %1177 = vmatpush1.msra.mxu0 %v1143
        %1178 = vmatprep.subr.mxu0 0.0
        %1179 = vmatpush1.msra.mxu0 %v1144
        %1180 = vmatprep.subr.mxu0 0.0
        %1181 = vmatpush1.msra.mxu0 %v1145
        %1182 = vmatprep.subr.mxu0 0.0
        %1183 = vmatpush1.msra.mxu0 %v1146
        %1184 = vmatprep.subr.mxu0 0.0
        %1185 = vmatpush1.msra.mxu0 %v1147
        %1186 = vmatprep.subr.mxu0 0.0
        %1187 = vmatpush1.msra.mxu0 %v1148
        %1188 = vmatprep.subr.mxu0 0.0
        %1189 = vmatpush1.msra.mxu0 0.0
        %1190 = vmatprep.subr.mxu0 0.0
        %1191 = vmatpush1.msra.mxu0 0.0
        %1192 = vmatprep.subr.mxu0 0.0
        %1193 = vmatpush1.msra.mxu0 0.0
        %1194 = vmatprep.subr.mxu0 0.0
        %1195 = vmatpush1.msra.mxu0 0.0
        %1196 = vmatprep.subr.mxu0 0.0
        %1197 = vmatpush1.msra.mxu0 0.0
        %1198 = vmatprep.subr.mxu0 0.0
        %1199 = vmatpush1.msra.mxu0 0.0
        %1200 = vmatprep.subr.mxu0 0.0
        %1201 = vmatpush1.msra.mxu0 0.0
        %1202 = vmatprep.subr.mxu0 0.0
        %1203 = vmatpush1.msra.mxu0 0.0
        %1204 = vmatprep.subr.mxu0 0.0
        %1205 = vmatpush1.msra.mxu0 0.0
        %1206 = vmatprep.subr.mxu0 0.0
        %1207 = vmatpush1.msra.mxu0 0.0
        %1208 = vmatprep.subr.mxu0 0.0
        %1209 = vmatpush1.msra.mxu0 0.0
        %1210 = vmatprep.subr.mxu0 0.0
        %1211 = vmatpush1.msra.mxu0 0.0
        %1212 = vmatprep.subr.mxu0 0.0
        %1213 = vmatpush1.msra.mxu0 0.0
        %1214 = vmatprep.subr.mxu0 0.0
        %1215 = vmatpush1.msra.mxu0 0.0
        %1216 = vmatprep.subr.mxu0 0.0
        %1217 = vmatpush1.msra.mxu0 0.0
        %1218 = vmatprep.subr.mxu0 0.0
        %1219 = vmatpush1.msra.mxu0 0.0
        %1220 = vmatprep.mubr.f32.mxu0 0.0
        %1221 = vmatmul.mubr.f32.gmra.mrb[0].mxu0 %v1069
        %v1222 = vpop.f32.mrb[0].mxu0
        %v1223 = vadd.f32 %v1154, %v1222
        %v1224 = vpop.f32.mrb[0].mxu0
        %1225 = vmatprep.mubr.f32.mxu0 0.0
        %1226 = vmatmul.mubr.f32.gmra.mrb[0].mxu0 %v1070
        %v1227 = vpop.f32.mrb[0].mxu0
        %v1228 = vadd.f32 %v1154, %v1227
        %v1229 = vpop.f32.mrb[0].mxu0
        %1230 = vmatprep.mubr.f32.mxu0 0.0
        %1231 = vmatmul.mubr.f32.gmra.mrb[0].mxu0 %v1071
        %v1232 = vpop.f32.mrb[0].mxu0
        %v1233 = vadd.f32 %v1154, %v1232
        %v1234 = vpop.f32.mrb[0].mxu0
        %1235 = vmatprep.mubr.f32.mxu0 0.0
        %1236 = vmatmul.mubr.f32.gmra.mrb[0].mxu0 %v1072
        %v1237 = vpop.f32.mrb[0].mxu0
        %v1238 = vadd.f32 %v1154, %v1237
        %v1239 = vpop.f32.mrb[0].mxu0
        %1240 = vmatprep.mubr.f32.mxu0 0.0
        %1241 = vmatmul.mubr.f32.gmra.mrb[0].mxu0 %v1073
        %v1242 = vpop.f32.mrb[0].mxu0
        %v1243 = vadd.f32 %v1154, %v1242
        %v1244 = vpop.f32.mrb[0].mxu0
        %1245 = vmatprep.mubr.f32.mxu0 0.0
        %1246 = vmatmul.mubr.f32.gmra.mrb[0].mxu0 %v1074
        %v1247 = vpop.f32.mrb[0].mxu0
        %v1248 = vadd.f32 %v1154, %v1247
        %v1249 = vpop.f32.mrb[0].mxu0
        %1250 = vmatprep.mubr.f32.mxu0 0.0
        %1251 = vmatmul.mubr.f32.gmra.mrb[0].mxu0 %v1075
        %v1252 = vpop.f32.mrb[0].mxu0
        %v1253 = vadd.f32 %v1154, %v1252
        %v1254 = vpop.f32.mrb[0].mxu0
        %1255 = vmatprep.mubr.f32.mxu0 0.0
        %1256 = vmatmul.mubr.f32.gmra.mrb[0].mxu0 %v1076
        %v1257 = vpop.f32.mrb[0].mxu0
        %v1258 = vadd.f32 %v1154, %v1257
        %v1259 = vpop.f32.mrb[0].mxu0
        %1260 = vmatprep.mubr.f32.mxu0 0.0
        %1261 = vmatmul.mubr.f32.gmra.mrb[0].mxu0 %v1077
        %v1262 = vpop.f32.mrb[0].mxu0
        %v1263 = vadd.f32 %v1154, %v1262
        %v1264 = vpop.f32.mrb[0].mxu0
        %1265 = vmatprep.mubr.f32.mxu0 0.0
        %1266 = vmatmul.mubr.f32.gmra.mrb[0].mxu0 %v1078
        %v1267 = vpop.f32.mrb[0].mxu0
        %v1268 = vadd.f32 %v1154, %v1267
        %v1269 = vpop.f32.mrb[0].mxu0
        %1270 = vmatprep.mubr.f32.mxu0 0.0
        %1271 = vmatmul.mubr.f32.gmra.mrb[0].mxu0 %v1079
        %v1272 = vpop.f32.mrb[0].mxu0
        %v1273 = vadd.f32 %v1154, %v1272
        %v1274 = vpop.f32.mrb[0].mxu0
        %1275 = vmatprep.mubr.f32.mxu0 0.0
        %1276 = vmatmul.mubr.f32.gmra.mrb[0].mxu0 %v1080
        %v1277 = vpop.f32.mrb[0].mxu0
        %v1278 = vadd.f32 %v1154, %v1277
        %v1279 = vpop.f32.mrb[0].mxu0
        %1280 = vmatprep.mubr.f32.mxu0 0.0
        %1281 = vmatmul.mubr.f32.gmra.mrb[0].mxu0 %v1081
        %v1282 = vpop.f32.mrb[0].mxu0
        %v1283 = vadd.f32 %v1154, %v1282
        %v1284 = vpop.f32.mrb[0].mxu0
        %1285 = vmatprep.mubr.f32.mxu0 0.0
        %1286 = vmatmul.mubr.f32.gmra.mrb[0].mxu0 %v1082
        %v1287 = vpop.f32.mrb[0].mxu0
        %v1288 = vadd.f32 %v1154, %v1287
        %v1289 = vpop.f32.mrb[0].mxu0
        %1290 = vmatprep.mubr.f32.mxu0 0.0
        %1291 = vmatmul.mubr.f32.gmra.mrb[0].mxu0 %v1083
        %v1292 = vpop.f32.mrb[0].mxu0
        %v1293 = vadd.f32 %v1154, %v1292
        %v1294 = vpop.f32.mrb[0].mxu0
        %1295 = vmatprep.mubr.f32.mxu0 0.0
        %1296 = vmatmul.mubr.f32.gmra.mrb[0].mxu0 %v1084
        %v1297 = vpop.f32.mrb[0].mxu0
        %v1298 = vadd.f32 %v1154, %v1297
        %v1299 = vpop.f32.mrb[0].mxu0
        %1300 = vmatprep.mubr.f32.mxu0 0.0
        %1301 = vmatmul.mubr.f32.gmra.mrb[0].mxu0 %v1085
        %v1302 = vpop.f32.mrb[0].mxu0
        %v1303 = vadd.f32 %v1154, %v1302
        %v1304 = vpop.f32.mrb[0].mxu0
        %1305 = vmatprep.mubr.f32.mxu0 0.0
        %1306 = vmatmul.mubr.f32.gmra.mrb[0].mxu0 %v1086
        %v1307 = vpop.f32.mrb[0].mxu0
        %v1308 = vadd.f32 %v1154, %v1307
        %v1309 = vpop.f32.mrb[0].mxu0
        %1310 = vmatprep.mubr.f32.mxu0 0.0
        %1311 = vmatmul.mubr.f32.gmra.mrb[0].mxu0 %v1087
        %v1312 = vpop.f32.mrb[0].mxu0
        %v1313 = vadd.f32 %v1154, %v1312
        %v1314 = vpop.f32.mrb[0].mxu0
        %1315 = vmatprep.mubr.f32.mxu0 0.0
        %1316 = vmatmul.mubr.f32.gmra.mrb[0].mxu0 %v1088
        %v1317 = vpop.f32.mrb[0].mxu0
        %v1318 = vadd.f32 %v1154, %v1317
        %v1319 = vpop.f32.mrb[0].mxu0
        %1320 = vmatprep.mubr.f32.mxu0 0.0
        %1321 = vmatmul.mubr.f32.gmra.mrb[0].mxu0 %v1089
        %v1322 = vpop.f32.mrb[0].mxu0
        %v1323 = vadd.f32 %v1154, %v1322
        %v1324 = vpop.f32.mrb[0].mxu0
        %1325 = vmatprep.mubr.f32.mxu0 0.0
        %1326 = vmatmul.mubr.f32.gmra.mrb[0].mxu0 %v1090
        %v1327 = vpop.f32.mrb[0].mxu0
        %v1328 = vadd.f32 %v1154, %v1327
        %v1329 = vpop.f32.mrb[0].mxu0
        %1330 = vmatprep.mubr.f32.mxu0 0.0
        %1331 = vmatmul.mubr.f32.gmra.mrb[0].mxu0 %v1091
        %v1332 = vpop.f32.mrb[0].mxu0
        %v1333 = vadd.f32 %v1154, %v1332
        %v1334 = vpop.f32.mrb[0].mxu0
        %1335 = vmatprep.mubr.f32.mxu0 0.0
        %1336 = vmatmul.mubr.f32.gmra.mrb[0].mxu0 %v1092
        %v1337 = vpop.f32.mrb[0].mxu0
        %v1338 = vadd.f32 %v1154, %v1337
        %v1339 = vpop.f32.mrb[0].mxu0
        %1340 = vmatprep.mubr.f32.mxu0 0.0
        %1341 = vmatmul.mubr.f32.gmra.mrb[0].mxu0 %v1093
        %v1342 = vpop.f32.mrb[0].mxu0
        %v1343 = vadd.f32 %v1154, %v1342
        %v1344 = vpop.f32.mrb[0].mxu0
        %1345 = vmatprep.mubr.f32.mxu0 0.0
        %1346 = vmatmul.mubr.f32.gmra.mrb[0].mxu0 %v1094
        %v1347 = vpop.f32.mrb[0].mxu0
        %v1348 = vadd.f32 %v1154, %v1347
        %v1349 = vpop.f32.mrb[0].mxu0
        %1350 = vmatprep.mubr.f32.mxu0 0.0
        %1351 = vmatmul.mubr.f32.gmra.mrb[0].mxu0 %v1095
        %v1352 = vpop.f32.mrb[0].mxu0
        %v1353 = vadd.f32 %v1154, %v1352
        %v1354 = vpop.f32.mrb[0].mxu0
        %1355 = vmatprep.mubr.f32.mxu0 0.0
        %1356 = vmatmul.mubr.f32.gmra.mrb[0].mxu0 %v1096
        %v1357 = vpop.f32.mrb[0].mxu0
        %v1358 = vadd.f32 %v1154, %v1357
        %v1359 = vpop.f32.mrb[0].mxu0
        %1360 = vmatprep.mubr.f32.mxu0 0.0
        %1361 = vmatmul.mubr.f32.gmra.mrb[0].mxu0 %v1097
        %v1362 = vpop.f32.mrb[0].mxu0
        %v1363 = vadd.f32 %v1154, %v1362
        %v1364 = vpop.f32.mrb[0].mxu0
        %1365 = vmatprep.mubr.f32.mxu0 0.0
        %1366 = vmatmul.mubr.f32.gmra.mrb[0].mxu0 %v1098
        %v1367 = vpop.f32.mrb[0].mxu0
        %v1368 = vadd.f32 %v1154, %v1367
        %v1369 = vpop.f32.mrb[0].mxu0
        %1370 = vmatprep.mubr.f32.mxu0 0.0
        %1371 = vmatmul.mubr.f32.gmra.mrb[0].mxu0 %v1099
        %v1372 = vpop.f32.mrb[0].mxu0
        %v1373 = vadd.f32 %v1154, %v1372
        %v1374 = vpop.f32.mrb[0].mxu0
        %1375 = vmatprep.mubr.f32.mxu0 0.0
        %1376 = vmatmul.mubr.f32.gmra.mrb[0].mxu0 %v1100
        %v1377 = vpop.f32.mrb[0].mxu0
        %v1378 = vadd.f32 %v1154, %v1377
        %v1379 = vpop.f32.mrb[0].mxu0
        %1380 = vmatprep.mubr.f32.mxu0 0.0
        %1381 = vmatmul.mubr.f32.gmra.mrb[0].mxu0 %v1101
        %v1382 = vpop.f32.mrb[0].mxu0
        %v1383 = vadd.f32 %v1154, %v1382
        %v1384 = vpop.f32.mrb[0].mxu0
        %1385 = vmatprep.mubr.f32.mxu0 0.0
        %1386 = vmatmul.mubr.f32.gmra.mrb[0].mxu0 %v1102
        %v1387 = vpop.f32.mrb[0].mxu0
        %v1388 = vadd.f32 %v1154, %v1387
        %v1389 = vpop.f32.mrb[0].mxu0
        %1390 = vmatprep.mubr.f32.mxu0 0.0
        %1391 = vmatmul.mubr.f32.gmra.mrb[0].mxu0 %v1103
        %v1392 = vpop.f32.mrb[0].mxu0
        %v1393 = vadd.f32 %v1154, %v1392
        %v1394 = vpop.f32.mrb[0].mxu0
        %1395 = vmatprep.mubr.f32.mxu0 0.0
        %1396 = vmatmul.mubr.f32.gmra.mrb[0].mxu0 %v1104
        %v1397 = vpop.f32.mrb[0].mxu0
        %v1398 = vadd.f32 %v1154, %v1397
        %v1399 = vpop.f32.mrb[0].mxu0
        %1400 = vmatprep.mubr.f32.mxu0 0.0
        %1401 = vmatmul.mubr.f32.gmra.mrb[0].mxu0 %v1105
        %v1402 = vpop.f32.mrb[0].mxu0
        %v1403 = vadd.f32 %v1154, %v1402
        %v1404 = vpop.f32.mrb[0].mxu0
        %1405 = vmatprep.mubr.f32.mxu0 0.0
        %1406 = vmatmul.mubr.f32.gmra.mrb[0].mxu0 %v1106
        %v1407 = vpop.f32.mrb[0].mxu0
        %v1408 = vadd.f32 %v1154, %v1407
        %v1409 = vpop.f32.mrb[0].mxu0
        %1410 = vmatprep.mubr.f32.mxu0 0.0
        %1411 = vmatmul.mubr.f32.gmra.mrb[0].mxu0 %v1107
        %v1412 = vpop.f32.mrb[0].mxu0
        %v1413 = vadd.f32 %v1154, %v1412
        %v1414 = vpop.f32.mrb[0].mxu0
        %1415 = vmatprep.mubr.f32.mxu0 0.0
        %1416 = vmatmul.mubr.f32.gmra.mrb[0].mxu0 %v1108
        %v1417 = vpop.f32.mrb[0].mxu0
        %v1418 = vadd.f32 %v1154, %v1417
        %v1419 = vpop.f32.mrb[0].mxu0
        %1420 = vmatprep.mubr.f32.mxu0 0.0
        %1421 = vmatmul.mubr.f32.gmra.mrb[0].mxu0 %v1109
        %v1422 = vpop.f32.mrb[0].mxu0
        %v1423 = vadd.f32 %v1154, %v1422
        %v1424 = vpop.f32.mrb[0].mxu0
        %1425 = vmatprep.mubr.f32.mxu0 0.0
        %1426 = vmatmul.mubr.f32.gmra.mrb[0].mxu0 %v1110
        %v1427 = vpop.f32.mrb[0].mxu0
        %v1428 = vadd.f32 %v1154, %v1427
        %v1429 = vpop.f32.mrb[0].mxu0
        %1430 = vmatprep.mubr.f32.mxu0 0.0
        %1431 = vmatmul.mubr.f32.gmra.mrb[0].mxu0 %v1111
        %v1432 = vpop.f32.mrb[0].mxu0
        %v1433 = vadd.f32 %v1154, %v1432
        %v1434 = vpop.f32.mrb[0].mxu0
        %1435 = vmatprep.mubr.f32.mxu0 0.0
        %1436 = vmatmul.mubr.f32.gmra.mrb[0].mxu0 %v1112
        %v1437 = vpop.f32.mrb[0].mxu0
        %v1438 = vadd.f32 %v1154, %v1437
        %v1439 = vpop.f32.mrb[0].mxu0
        %1440 = vmatprep.mubr.f32.mxu0 0.0
        %1441 = vmatmul.mubr.f32.gmra.mrb[0].mxu0 %v1113
        %v1442 = vpop.f32.mrb[0].mxu0
        %v1443 = vadd.f32 %v1154, %v1442
        %v1444 = vpop.f32.mrb[0].mxu0
        %1445 = vmatprep.mubr.f32.mxu0 0.0
        %1446 = vmatmul.mubr.f32.gmra.mrb[0].mxu0 %v1114
        %v1447 = vpop.f32.mrb[0].mxu0
        %v1448 = vadd.f32 %v1154, %v1447
        %v1449 = vpop.f32.mrb[0].mxu0
        %1450 = vmatprep.mubr.f32.mxu0 0.0
        %1451 = vmatmul.mubr.f32.gmra.mrb[0].mxu0 %v1115
        %v1452 = vpop.f32.mrb[0].mxu0
        %v1453 = vadd.f32 %v1154, %v1452
        %v1454 = vpop.f32.mrb[0].mxu0
        %1455 = vmatprep.mubr.f32.mxu0 0.0
        %1456 = vmatmul.mubr.f32.gmra.mrb[0].mxu0 %v1116
        %v1457 = vpop.f32.mrb[0].mxu0
        %v1458 = vadd.f32 %v1154, %v1457
        %v1459 = vpop.f32.mrb[0].mxu0
        %1460 = vmatprep.mubr.f32.mxu0 0.0
        %1461 = vmatmul.mubr.f32.gmra.mrb[0].mxu0 %v1117
        %v1462 = vpop.f32.mrb[0].mxu0
        %v1463 = vadd.f32 %v1154, %v1462
        %v1464 = vpop.f32.mrb[0].mxu0
        %1465 = vmatprep.mubr.f32.mxu0 0.0
        %1466 = vmatmul.mubr.f32.gmra.mrb[0].mxu0 %v1118
        %v1467 = vpop.f32.mrb[0].mxu0
        %v1468 = vadd.f32 %v1154, %v1467
        %v1469 = vpop.f32.mrb[0].mxu0
        %1470 = vmatprep.mubr.f32.mxu0 0.0
        %1471 = vmatmul.mubr.f32.gmra.mrb[0].mxu0 %v1119
        %v1472 = vpop.f32.mrb[0].mxu0
        %v1473 = vadd.f32 %v1154, %v1472
        %v1474 = vpop.f32.mrb[0].mxu0
        %1475 = vmatprep.mubr.f32.mxu0 0.0
        %1476 = vmatmul.mubr.f32.gmra.mrb[0].mxu0 %v1120
        %v1477 = vpop.f32.mrb[0].mxu0
        %v1478 = vadd.f32 %v1154, %v1477
        %v1479 = vpop.f32.mrb[0].mxu0
        %1480 = vmatprep.mubr.f32.mxu0 0.0
        %1481 = vmatmul.mubr.f32.gmra.mrb[0].mxu0 %v1121
        %v1482 = vpop.f32.mrb[0].mxu0
        %v1483 = vadd.f32 %v1154, %v1482
        %v1484 = vpop.f32.mrb[0].mxu0
        %1485 = vmatprep.mubr.f32.mxu0 0.0
        %1486 = vmatmul.mubr.f32.gmra.mrb[0].mxu0 %v1122
        %v1487 = vpop.f32.mrb[0].mxu0
        %v1488 = vadd.f32 %v1154, %v1487
        %v1489 = vpop.f32.mrb[0].mxu0
        %1490 = vmatprep.mubr.f32.mxu0 0.0
        %1491 = vmatmul.mubr.f32.gmra.mrb[0].mxu0 %v1123
        %v1492 = vpop.f32.mrb[0].mxu0
        %v1493 = vadd.f32 %v1154, %v1492
        %v1494 = vpop.f32.mrb[0].mxu0
        %1495 = vmatprep.mubr.f32.mxu0 0.0
        %1496 = vmatmul.mubr.f32.gmra.mrb[0].mxu0 %v1124
        %v1497 = vpop.f32.mrb[0].mxu0
        %v1498 = vadd.f32 %v1154, %v1497
        %v1499 = vpop.f32.mrb[0].mxu0
        %1500 = vmatprep.mubr.f32.mxu0 0.0
        %1501 = vmatmul.mubr.f32.gmra.mrb[0].mxu0 %v1125
        %v1502 = vpop.f32.mrb[0].mxu0
        %v1503 = vadd.f32 %v1154, %v1502
        %v1504 = vpop.f32.mrb[0].mxu0
        %1505 = vmatprep.mubr.f32.mxu0 0.0
        %1506 = vmatmul.mubr.f32.gmra.mrb[0].mxu0 %v1126
        %v1507 = vpop.f32.mrb[0].mxu0
        %v1508 = vadd.f32 %v1154, %v1507
        %v1509 = vpop.f32.mrb[0].mxu0
        %1510 = vmatprep.mubr.f32.mxu0 0.0
        %1511 = vmatmul.mubr.f32.gmra.mrb[0].mxu0 %v1127
        %v1512 = vpop.f32.mrb[0].mxu0
        %v1513 = vadd.f32 %v1154, %v1512
        %v1514 = vpop.f32.mrb[0].mxu0
        %1515 = vmatprep.mubr.f32.mxu0 0.0
        %1516 = vmatmul.mubr.f32.gmra.mrb[0].mxu0 %v1128
        %v1517 = vpop.f32.mrb[0].mxu0
        %v1518 = vadd.f32 %v1154, %v1517
        %v1519 = vpop.f32.mrb[0].mxu0
        %1520 = vmatprep.mubr.f32.mxu0 0.0
        %1521 = vmatmul.mubr.f32.gmra.mrb[0].mxu0 %v1129
        %v1522 = vpop.f32.mrb[0].mxu0
        %v1523 = vadd.f32 %v1154, %v1522
        %v1524 = vpop.f32.mrb[0].mxu0
        %1525 = vmatprep.mubr.f32.mxu0 0.0
        %1526 = vmatmul.mubr.f32.gmra.mrb[0].mxu0 %v1130
        %v1527 = vpop.f32.mrb[0].mxu0
        %v1528 = vadd.f32 %v1154, %v1527
        %v1529 = vpop.f32.mrb[0].mxu0
        %1530 = vmatprep.mubr.f32.mxu0 0.0
        %1531 = vmatmul.mubr.f32.gmra.mrb[0].mxu0 %v1131
        %v1532 = vpop.f32.mrb[0].mxu0
        %v1533 = vadd.f32 %v1154, %v1532
        %v1534 = vpop.f32.mrb[0].mxu0
        %1535 = vmatprep.mubr.f32.mxu0 0.0
        %1536 = vmatmul.mubr.f32.gmra.mrb[0].mxu0 %v1132
        %v1537 = vpop.f32.mrb[0].mxu0
        %v1538 = vadd.f32 %v1154, %v1537
        %v1539 = vpop.f32.mrb[0].mxu0
        %1540 = vdwg.mxu0
        %v1541 = vmax.f32 %v1223, 0.0
        %v1542 = vmax.f32 %v1228, 0.0
        %v1543 = vmax.f32 %v1233, 0.0
        %v1544 = vmax.f32 %v1238, 0.0
        %v1545 = vmax.f32 %v1243, 0.0
        %v1546 = vmax.f32 %v1248, 0.0
        %v1547 = vmax.f32 %v1253, 0.0
        %v1548 = vmax.f32 %v1258, 0.0
        %v1549 = vmax.f32 %v1263, 0.0
        %v1550 = vmax.f32 %v1268, 0.0
        %v1551 = vmax.f32 %v1273, 0.0
        %v1552 = vmax.f32 %v1278, 0.0
        %v1553 = vmax.f32 %v1283, 0.0
        %v1554 = vmax.f32 %v1288, 0.0
        %v1555 = vmax.f32 %v1293, 0.0
        %v1556 = vmax.f32 %v1298, 0.0
        %v1557 = vmax.f32 %v1303, 0.0
        %v1558 = vmax.f32 %v1308, 0.0
        %v1559 = vmax.f32 %v1313, 0.0
        %v1560 = vmax.f32 %v1318, 0.0
        %v1561 = vmax.f32 %v1323, 0.0
        %v1562 = vmax.f32 %v1328, 0.0
        %v1563 = vmax.f32 %v1333, 0.0
        %v1564 = vmax.f32 %v1338, 0.0
        %v1565 = vmax.f32 %v1343, 0.0
        %v1566 = vmax.f32 %v1348, 0.0
        %v1567 = vmax.f32 %v1353, 0.0
        %v1568 = vmax.f32 %v1358, 0.0
        %v1569 = vmax.f32 %v1363, 0.0
        %v1570 = vmax.f32 %v1368, 0.0
        %v1571 = vmax.f32 %v1373, 0.0
        %v1572 = vmax.f32 %v1378, 0.0
        %v1573 = vmax.f32 %v1383, 0.0
        %v1574 = vmax.f32 %v1388, 0.0
        %v1575 = vmax.f32 %v1393, 0.0
        %v1576 = vmax.f32 %v1398, 0.0
        %v1577 = vmax.f32 %v1403, 0.0
        %v1578 = vmax.f32 %v1408, 0.0
        %v1579 = vmax.f32 %v1413, 0.0
        %v1580 = vmax.f32 %v1418, 0.0
        %v1581 = vmax.f32 %v1423, 0.0
        %v1582 = vmax.f32 %v1428, 0.0
        %v1583 = vmax.f32 %v1433, 0.0
        %v1584 = vmax.f32 %v1438, 0.0
        %v1585 = vmax.f32 %v1443, 0.0
        %v1586 = vmax.f32 %v1448, 0.0
        %v1587 = vmax.f32 %v1453, 0.0
        %v1588 = vmax.f32 %v1458, 0.0
        %v1589 = vmax.f32 %v1463, 0.0
        %v1590 = vmax.f32 %v1468, 0.0
        %v1591 = vmax.f32 %v1473, 0.0
        %v1592 = vmax.f32 %v1478, 0.0
        %v1593 = vmax.f32 %v1483, 0.0
        %v1594 = vmax.f32 %v1488, 0.0
        %v1595 = vmax.f32 %v1493, 0.0
        %v1596 = vmax.f32 %v1498, 0.0
        %v1597 = vmax.f32 %v1503, 0.0
        %v1598 = vmax.f32 %v1508, 0.0
        %v1599 = vmax.f32 %v1513, 0.0
        %v1600 = vmax.f32 %v1518, 0.0
        %v1601 = vmax.f32 %v1523, 0.0
        %v1602 = vmax.f32 %v1528, 0.0
        %v1603 = vmax.f32 %v1533, 0.0
        %v1604 = vmax.f32 %v1538, 0.0
        %v1605 = vld [vmem:[#allocation7] sm:$0xff]
        %v1606 = vld [vmem:[#allocation7 + $0x8] sm:$0xff]
        %v1607 = vld [vmem:[#allocation7 + $0x10] sm:$0xff]
        %v1608 = vld [vmem:[#allocation7 + $0x18] sm:$0xff]
        %v1609 = vld [vmem:[#allocation7 + $0x20] sm:$0xff]
        %v1610 = vld [vmem:[#allocation7 + $0x28] sm:$0xff]
        %v1611 = vld [vmem:[#allocation7 + $0x30] sm:$0xff]
        %v1612 = vld [vmem:[#allocation7 + $0x38] sm:$0xff]
        %v1613 = vld [vmem:[#allocation7 + $0x40] sm:$0xff]
        %v1614 = vld [vmem:[#allocation7 + $0x48] sm:$0xff]
        %v1615 = vld [vmem:[#allocation7 + $0x50] sm:$0xff]
        %v1616 = vld [vmem:[#allocation7 + $0x58] sm:$0xff]
        %v1617 = vld [vmem:[#allocation7 + $0x60] sm:$0xff]
        %v1618 = vld [vmem:[#allocation7 + $0x68] sm:$0xff]
        %v1619 = vld [vmem:[#allocation7 + $0x70] sm:$0xff]
        %v1620 = vld [vmem:[#allocation7 + $0x78] sm:$0xff]
        %v1621 = vld [vmem:[%s7] sm:$0x1]
        %v1623 = vlaneseq
        %v1624 = vshrl.u32 %v1623, 7
        %v1625 = vsub.s32 0, %v1624
        %v1626 = vrot.slane %v1621, %v1625
        %1628 = vmatprep.subr.mxu0 0.0
        %1629 = vmatpush1.msra.mxu0 %v1605
        %1630 = vmatprep.subr.mxu0 0.0
        %1631 = vmatpush1.msra.mxu0 %v1606
        %1632 = vmatprep.subr.mxu0 0.0
        %1633 = vmatpush1.msra.mxu0 %v1607
        %1634 = vmatprep.subr.mxu0 0.0
        %1635 = vmatpush1.msra.mxu0 %v1608
        %1636 = vmatprep.subr.mxu0 0.0
        %1637 = vmatpush1.msra.mxu0 %v1609
        %1638 = vmatprep.subr.mxu0 0.0
        %1639 = vmatpush1.msra.mxu0 %v1610
        %1640 = vmatprep.subr.mxu0 0.0
        %1641 = vmatpush1.msra.mxu0 %v1611
        %1642 = vmatprep.subr.mxu0 0.0
        %1643 = vmatpush1.msra.mxu0 %v1612
        %1644 = vmatprep.subr.mxu0 0.0
        %1645 = vmatpush1.msra.mxu0 %v1613
        %1646 = vmatprep.subr.mxu0 0.0
        %1647 = vmatpush1.msra.mxu0 %v1614
        %1648 = vmatprep.subr.mxu0 0.0
        %1649 = vmatpush1.msra.mxu0 %v1615
        %1650 = vmatprep.subr.mxu0 0.0
        %1651 = vmatpush1.msra.mxu0 %v1616
        %1652 = vmatprep.subr.mxu0 0.0
        %1653 = vmatpush1.msra.mxu0 %v1617
        %1654 = vmatprep.subr.mxu0 0.0
        %1655 = vmatpush1.msra.mxu0 %v1618
        %1656 = vmatprep.subr.mxu0 0.0
        %1657 = vmatpush1.msra.mxu0 %v1619
        %1658 = vmatprep.subr.mxu0 0.0
        %1659 = vmatpush1.msra.mxu0 %v1620
        %1660 = vmatprep.subr.mxu0 0.0
        %1661 = vmatpush1.msra.mxu0 0.0
        %1662 = vmatprep.subr.mxu0 0.0
        %1663 = vmatpush1.msra.mxu0 0.0
        %1664 = vmatprep.subr.mxu0 0.0
        %1665 = vmatpush1.msra.mxu0 0.0
        %1666 = vmatprep.subr.mxu0 0.0
        %1667 = vmatpush1.msra.mxu0 0.0
        %1668 = vmatprep.subr.mxu0 0.0
        %1669 = vmatpush1.msra.mxu0 0.0
        %1670 = vmatprep.subr.mxu0 0.0
        %1671 = vmatpush1.msra.mxu0 0.0
        %1672 = vmatprep.subr.mxu0 0.0
        %1673 = vmatpush1.msra.mxu0 0.0
        %1674 = vmatprep.subr.mxu0 0.0
        %1675 = vmatpush1.msra.mxu0 0.0
        %1676 = vmatprep.subr.mxu0 0.0
        %1677 = vmatpush1.msra.mxu0 0.0
        %1678 = vmatprep.subr.mxu0 0.0
        %1679 = vmatpush1.msra.mxu0 0.0
        %1680 = vmatprep.subr.mxu0 0.0
        %1681 = vmatpush1.msra.mxu0 0.0
        %1682 = vmatprep.subr.mxu0 0.0
        %1683 = vmatpush1.msra.mxu0 0.0
        %1684 = vmatprep.subr.mxu0 0.0
        %1685 = vmatpush1.msra.mxu0 0.0
        %1686 = vmatprep.subr.mxu0 0.0
        %1687 = vmatpush1.msra.mxu0 0.0
        %1688 = vmatprep.subr.mxu0 0.0
        %1689 = vmatpush1.msra.mxu0 0.0
        %1690 = vmatprep.subr.mxu0 0.0
        %1691 = vmatpush1.msra.mxu0 0.0
        %1692 = vmatprep.mubr.f32.mxu0 0.0
        %1693 = vmatmul.mubr.f32.gmra.mrb[0].mxu0 %v1541
        %v1694 = vpop.f32.mrb[0].mxu0
        %v1695 = vadd.f32 %v1626, %v1694
        %v1696 = vpop.f32.mrb[0].mxu0
        %1697 = vmatprep.mubr.f32.mxu0 0.0
        %1698 = vmatmul.mubr.f32.gmra.mrb[0].mxu0 %v1542
        %v1699 = vpop.f32.mrb[0].mxu0
        %v1700 = vadd.f32 %v1626, %v1699
        %v1701 = vpop.f32.mrb[0].mxu0
        %1702 = vmatprep.mubr.f32.mxu0 0.0
        %1703 = vmatmul.mubr.f32.gmra.mrb[0].mxu0 %v1543
        %v1704 = vpop.f32.mrb[0].mxu0
        %v1705 = vadd.f32 %v1626, %v1704
        %v1706 = vpop.f32.mrb[0].mxu0
        %1707 = vmatprep.mubr.f32.mxu0 0.0
        %1708 = vmatmul.mubr.f32.gmra.mrb[0].mxu0 %v1544
        %v1709 = vpop.f32.mrb[0].mxu0
        %v1710 = vadd.f32 %v1626, %v1709
        %v1711 = vpop.f32.mrb[0].mxu0
        %1712 = vmatprep.mubr.f32.mxu0 0.0
        %1713 = vmatmul.mubr.f32.gmra.mrb[0].mxu0 %v1545
        %v1714 = vpop.f32.mrb[0].mxu0
        %v1715 = vadd.f32 %v1626, %v1714
        %v1716 = vpop.f32.mrb[0].mxu0
        %1717 = vmatprep.mubr.f32.mxu0 0.0
        %1718 = vmatmul.mubr.f32.gmra.mrb[0].mxu0 %v1546
        %v1719 = vpop.f32.mrb[0].mxu0
        %v1720 = vadd.f32 %v1626, %v1719
        %v1721 = vpop.f32.mrb[0].mxu0
        %1722 = vmatprep.mubr.f32.mxu0 0.0
        %1723 = vmatmul.mubr.f32.gmra.mrb[0].mxu0 %v1547
        %v1724 = vpop.f32.mrb[0].mxu0
        %v1725 = vadd.f32 %v1626, %v1724
        %v1726 = vpop.f32.mrb[0].mxu0
        %1727 = vmatprep.mubr.f32.mxu0 0.0
        %1728 = vmatmul.mubr.f32.gmra.mrb[0].mxu0 %v1548
        %v1729 = vpop.f32.mrb[0].mxu0
        %v1730 = vadd.f32 %v1626, %v1729
        %v1731 = vpop.f32.mrb[0].mxu0
        %1732 = vmatprep.mubr.f32.mxu0 0.0
        %1733 = vmatmul.mubr.f32.gmra.mrb[0].mxu0 %v1549
        %v1734 = vpop.f32.mrb[0].mxu0
        %v1735 = vadd.f32 %v1626, %v1734
        %v1736 = vpop.f32.mrb[0].mxu0
        %1737 = vmatprep.mubr.f32.mxu0 0.0
        %1738 = vmatmul.mubr.f32.gmra.mrb[0].mxu0 %v1550
        %v1739 = vpop.f32.mrb[0].mxu0
        %v1740 = vadd.f32 %v1626, %v1739
        %v1741 = vpop.f32.mrb[0].mxu0
        %1742 = vmatprep.mubr.f32.mxu0 0.0
        %1743 = vmatmul.mubr.f32.gmra.mrb[0].mxu0 %v1551
        %v1744 = vpop.f32.mrb[0].mxu0
        %v1745 = vadd.f32 %v1626, %v1744
        %v1746 = vpop.f32.mrb[0].mxu0
        %1747 = vmatprep.mubr.f32.mxu0 0.0
        %1748 = vmatmul.mubr.f32.gmra.mrb[0].mxu0 %v1552
        %v1749 = vpop.f32.mrb[0].mxu0
        %v1750 = vadd.f32 %v1626, %v1749
        %v1751 = vpop.f32.mrb[0].mxu0
        %1752 = vmatprep.mubr.f32.mxu0 0.0
        %1753 = vmatmul.mubr.f32.gmra.mrb[0].mxu0 %v1553
        %v1754 = vpop.f32.mrb[0].mxu0
        %v1755 = vadd.f32 %v1626, %v1754
        %v1756 = vpop.f32.mrb[0].mxu0
        %1757 = vmatprep.mubr.f32.mxu0 0.0
        %1758 = vmatmul.mubr.f32.gmra.mrb[0].mxu0 %v1554
        %v1759 = vpop.f32.mrb[0].mxu0
        %v1760 = vadd.f32 %v1626, %v1759
        %v1761 = vpop.f32.mrb[0].mxu0
        %1762 = vmatprep.mubr.f32.mxu0 0.0
        %1763 = vmatmul.mubr.f32.gmra.mrb[0].mxu0 %v1555
        %v1764 = vpop.f32.mrb[0].mxu0
        %v1765 = vadd.f32 %v1626, %v1764
        %v1766 = vpop.f32.mrb[0].mxu0
        %1767 = vmatprep.mubr.f32.mxu0 0.0
        %1768 = vmatmul.mubr.f32.gmra.mrb[0].mxu0 %v1556
        %v1769 = vpop.f32.mrb[0].mxu0
        %v1770 = vadd.f32 %v1626, %v1769
        %v1771 = vpop.f32.mrb[0].mxu0
        %1772 = vmatprep.mubr.f32.mxu0 0.0
        %1773 = vmatmul.mubr.f32.gmra.mrb[0].mxu0 %v1557
        %v1774 = vpop.f32.mrb[0].mxu0
        %v1775 = vadd.f32 %v1626, %v1774
        %v1776 = vpop.f32.mrb[0].mxu0
        %1777 = vmatprep.mubr.f32.mxu0 0.0
        %1778 = vmatmul.mubr.f32.gmra.mrb[0].mxu0 %v1558
        %v1779 = vpop.f32.mrb[0].mxu0
        %v1780 = vadd.f32 %v1626, %v1779
        %v1781 = vpop.f32.mrb[0].mxu0
        %1782 = vmatprep.mubr.f32.mxu0 0.0
        %1783 = vmatmul.mubr.f32.gmra.mrb[0].mxu0 %v1559
        %v1784 = vpop.f32.mrb[0].mxu0
        %v1785 = vadd.f32 %v1626, %v1784
        %v1786 = vpop.f32.mrb[0].mxu0
        %1787 = vmatprep.mubr.f32.mxu0 0.0
        %1788 = vmatmul.mubr.f32.gmra.mrb[0].mxu0 %v1560
        %v1789 = vpop.f32.mrb[0].mxu0
        %v1790 = vadd.f32 %v1626, %v1789
        %v1791 = vpop.f32.mrb[0].mxu0
        %1792 = vmatprep.mubr.f32.mxu0 0.0
        %1793 = vmatmul.mubr.f32.gmra.mrb[0].mxu0 %v1561
        %v1794 = vpop.f32.mrb[0].mxu0
        %v1795 = vadd.f32 %v1626, %v1794
        %v1796 = vpop.f32.mrb[0].mxu0
        %1797 = vmatprep.mubr.f32.mxu0 0.0
        %1798 = vmatmul.mubr.f32.gmra.mrb[0].mxu0 %v1562
        %v1799 = vpop.f32.mrb[0].mxu0
        %v1800 = vadd.f32 %v1626, %v1799
        %v1801 = vpop.f32.mrb[0].mxu0
        %1802 = vmatprep.mubr.f32.mxu0 0.0
        %1803 = vmatmul.mubr.f32.gmra.mrb[0].mxu0 %v1563
        %v1804 = vpop.f32.mrb[0].mxu0
        %v1805 = vadd.f32 %v1626, %v1804
        %v1806 = vpop.f32.mrb[0].mxu0
        %1807 = vmatprep.mubr.f32.mxu0 0.0
        %1808 = vmatmul.mubr.f32.gmra.mrb[0].mxu0 %v1564
        %v1809 = vpop.f32.mrb[0].mxu0
        %v1810 = vadd.f32 %v1626, %v1809
        %v1811 = vpop.f32.mrb[0].mxu0
        %1812 = vmatprep.mubr.f32.mxu0 0.0
        %1813 = vmatmul.mubr.f32.gmra.mrb[0].mxu0 %v1565
        %v1814 = vpop.f32.mrb[0].mxu0
        %v1815 = vadd.f32 %v1626, %v1814
        %v1816 = vpop.f32.mrb[0].mxu0
        %1817 = vmatprep.mubr.f32.mxu0 0.0
        %1818 = vmatmul.mubr.f32.gmra.mrb[0].mxu0 %v1566
        %v1819 = vpop.f32.mrb[0].mxu0
        %v1820 = vadd.f32 %v1626, %v1819
        %v1821 = vpop.f32.mrb[0].mxu0
        %1822 = vmatprep.mubr.f32.mxu0 0.0
        %1823 = vmatmul.mubr.f32.gmra.mrb[0].mxu0 %v1567
        %v1824 = vpop.f32.mrb[0].mxu0
        %v1825 = vadd.f32 %v1626, %v1824
        %v1826 = vpop.f32.mrb[0].mxu0
        %1827 = vmatprep.mubr.f32.mxu0 0.0
        %1828 = vmatmul.mubr.f32.gmra.mrb[0].mxu0 %v1568
        %v1829 = vpop.f32.mrb[0].mxu0
        %v1830 = vadd.f32 %v1626, %v1829
        %v1831 = vpop.f32.mrb[0].mxu0
        %1832 = vmatprep.mubr.f32.mxu0 0.0
        %1833 = vmatmul.mubr.f32.gmra.mrb[0].mxu0 %v1569
        %v1834 = vpop.f32.mrb[0].mxu0
        %v1835 = vadd.f32 %v1626, %v1834
        %v1836 = vpop.f32.mrb[0].mxu0
        %1837 = vmatprep.mubr.f32.mxu0 0.0
        %1838 = vmatmul.mubr.f32.gmra.mrb[0].mxu0 %v1570
        %v1839 = vpop.f32.mrb[0].mxu0
        %v1840 = vadd.f32 %v1626, %v1839
        %v1841 = vpop.f32.mrb[0].mxu0
        %1842 = vmatprep.mubr.f32.mxu0 0.0
        %1843 = vmatmul.mubr.f32.gmra.mrb[0].mxu0 %v1571
        %v1844 = vpop.f32.mrb[0].mxu0
        %v1845 = vadd.f32 %v1626, %v1844
        %v1846 = vpop.f32.mrb[0].mxu0
        %1847 = vmatprep.mubr.f32.mxu0 0.0
        %1848 = vmatmul.mubr.f32.gmra.mrb[0].mxu0 %v1572
        %v1849 = vpop.f32.mrb[0].mxu0
        %v1850 = vadd.f32 %v1626, %v1849
        %v1851 = vpop.f32.mrb[0].mxu0
        %1852 = vmatprep.mubr.f32.mxu0 0.0
        %1853 = vmatmul.mubr.f32.gmra.mrb[0].mxu0 %v1573
        %v1854 = vpop.f32.mrb[0].mxu0
        %v1855 = vadd.f32 %v1626, %v1854
        %v1856 = vpop.f32.mrb[0].mxu0
        %1857 = vmatprep.mubr.f32.mxu0 0.0
        %1858 = vmatmul.mubr.f32.gmra.mrb[0].mxu0 %v1574
        %v1859 = vpop.f32.mrb[0].mxu0
        %v1860 = vadd.f32 %v1626, %v1859
        %v1861 = vpop.f32.mrb[0].mxu0
        %1862 = vmatprep.mubr.f32.mxu0 0.0
        %1863 = vmatmul.mubr.f32.gmra.mrb[0].mxu0 %v1575
        %v1864 = vpop.f32.mrb[0].mxu0
        %v1865 = vadd.f32 %v1626, %v1864
        %v1866 = vpop.f32.mrb[0].mxu0
        %1867 = vmatprep.mubr.f32.mxu0 0.0
        %1868 = vmatmul.mubr.f32.gmra.mrb[0].mxu0 %v1576
        %v1869 = vpop.f32.mrb[0].mxu0
        %v1870 = vadd.f32 %v1626, %v1869
        %v1871 = vpop.f32.mrb[0].mxu0
        %1872 = vmatprep.mubr.f32.mxu0 0.0
        %1873 = vmatmul.mubr.f32.gmra.mrb[0].mxu0 %v1577
        %v1874 = vpop.f32.mrb[0].mxu0
        %v1875 = vadd.f32 %v1626, %v1874
        %v1876 = vpop.f32.mrb[0].mxu0
        %1877 = vmatprep.mubr.f32.mxu0 0.0
        %1878 = vmatmul.mubr.f32.gmra.mrb[0].mxu0 %v1578
        %v1879 = vpop.f32.mrb[0].mxu0
        %v1880 = vadd.f32 %v1626, %v1879
        %v1881 = vpop.f32.mrb[0].mxu0
        %1882 = vmatprep.mubr.f32.mxu0 0.0
        %1883 = vmatmul.mubr.f32.gmra.mrb[0].mxu0 %v1579
        %v1884 = vpop.f32.mrb[0].mxu0
        %v1885 = vadd.f32 %v1626, %v1884
        %v1886 = vpop.f32.mrb[0].mxu0
        %1887 = vmatprep.mubr.f32.mxu0 0.0
        %1888 = vmatmul.mubr.f32.gmra.mrb[0].mxu0 %v1580
        %v1889 = vpop.f32.mrb[0].mxu0
        %v1890 = vadd.f32 %v1626, %v1889
        %v1891 = vpop.f32.mrb[0].mxu0
        %1892 = vmatprep.mubr.f32.mxu0 0.0
        %1893 = vmatmul.mubr.f32.gmra.mrb[0].mxu0 %v1581
        %v1894 = vpop.f32.mrb[0].mxu0
        %v1895 = vadd.f32 %v1626, %v1894
        %v1896 = vpop.f32.mrb[0].mxu0
        %1897 = vmatprep.mubr.f32.mxu0 0.0
        %1898 = vmatmul.mubr.f32.gmra.mrb[0].mxu0 %v1582
        %v1899 = vpop.f32.mrb[0].mxu0
        %v1900 = vadd.f32 %v1626, %v1899
        %v1901 = vpop.f32.mrb[0].mxu0
        %1902 = vmatprep.mubr.f32.mxu0 0.0
        %1903 = vmatmul.mubr.f32.gmra.mrb[0].mxu0 %v1583
        %v1904 = vpop.f32.mrb[0].mxu0
        %v1905 = vadd.f32 %v1626, %v1904
        %v1906 = vpop.f32.mrb[0].mxu0
        %1907 = vmatprep.mubr.f32.mxu0 0.0
        %1908 = vmatmul.mubr.f32.gmra.mrb[0].mxu0 %v1584
        %v1909 = vpop.f32.mrb[0].mxu0
        %v1910 = vadd.f32 %v1626, %v1909
        %v1911 = vpop.f32.mrb[0].mxu0
        %1912 = vmatprep.mubr.f32.mxu0 0.0
        %1913 = vmatmul.mubr.f32.gmra.mrb[0].mxu0 %v1585
        %v1914 = vpop.f32.mrb[0].mxu0
        %v1915 = vadd.f32 %v1626, %v1914
        %v1916 = vpop.f32.mrb[0].mxu0
        %1917 = vmatprep.mubr.f32.mxu0 0.0
        %1918 = vmatmul.mubr.f32.gmra.mrb[0].mxu0 %v1586
        %v1919 = vpop.f32.mrb[0].mxu0
        %v1920 = vadd.f32 %v1626, %v1919
        %v1921 = vpop.f32.mrb[0].mxu0
        %1922 = vmatprep.mubr.f32.mxu0 0.0
        %1923 = vmatmul.mubr.f32.gmra.mrb[0].mxu0 %v1587
        %v1924 = vpop.f32.mrb[0].mxu0
        %v1925 = vadd.f32 %v1626, %v1924
        %v1926 = vpop.f32.mrb[0].mxu0
        %1927 = vmatprep.mubr.f32.mxu0 0.0
        %1928 = vmatmul.mubr.f32.gmra.mrb[0].mxu0 %v1588
        %v1929 = vpop.f32.mrb[0].mxu0
        %v1930 = vadd.f32 %v1626, %v1929
        %v1931 = vpop.f32.mrb[0].mxu0
        %1932 = vmatprep.mubr.f32.mxu0 0.0
        %1933 = vmatmul.mubr.f32.gmra.mrb[0].mxu0 %v1589
        %v1934 = vpop.f32.mrb[0].mxu0
        %v1935 = vadd.f32 %v1626, %v1934
        %v1936 = vpop.f32.mrb[0].mxu0
        %1937 = vmatprep.mubr.f32.mxu0 0.0
        %1938 = vmatmul.mubr.f32.gmra.mrb[0].mxu0 %v1590
        %v1939 = vpop.f32.mrb[0].mxu0
        %v1940 = vadd.f32 %v1626, %v1939
        %v1941 = vpop.f32.mrb[0].mxu0
        %1942 = vmatprep.mubr.f32.mxu0 0.0
        %1943 = vmatmul.mubr.f32.gmra.mrb[0].mxu0 %v1591
        %v1944 = vpop.f32.mrb[0].mxu0
        %v1945 = vadd.f32 %v1626, %v1944
        %v1946 = vpop.f32.mrb[0].mxu0
        %1947 = vmatprep.mubr.f32.mxu0 0.0
        %1948 = vmatmul.mubr.f32.gmra.mrb[0].mxu0 %v1592
        %v1949 = vpop.f32.mrb[0].mxu0
        %v1950 = vadd.f32 %v1626, %v1949
        %v1951 = vpop.f32.mrb[0].mxu0
        %1952 = vmatprep.mubr.f32.mxu0 0.0
        %1953 = vmatmul.mubr.f32.gmra.mrb[0].mxu0 %v1593
        %v1954 = vpop.f32.mrb[0].mxu0
        %v1955 = vadd.f32 %v1626, %v1954
        %v1956 = vpop.f32.mrb[0].mxu0
        %1957 = vmatprep.mubr.f32.mxu0 0.0
        %1958 = vmatmul.mubr.f32.gmra.mrb[0].mxu0 %v1594
        %v1959 = vpop.f32.mrb[0].mxu0
        %v1960 = vadd.f32 %v1626, %v1959
        %v1961 = vpop.f32.mrb[0].mxu0
        %1962 = vmatprep.mubr.f32.mxu0 0.0
        %1963 = vmatmul.mubr.f32.gmra.mrb[0].mxu0 %v1595
        %v1964 = vpop.f32.mrb[0].mxu0
        %v1965 = vadd.f32 %v1626, %v1964
        %v1966 = vpop.f32.mrb[0].mxu0
        %1967 = vmatprep.mubr.f32.mxu0 0.0
        %1968 = vmatmul.mubr.f32.gmra.mrb[0].mxu0 %v1596
        %v1969 = vpop.f32.mrb[0].mxu0
        %v1970 = vadd.f32 %v1626, %v1969
        %v1971 = vpop.f32.mrb[0].mxu0
        %1972 = vmatprep.mubr.f32.mxu0 0.0
        %1973 = vmatmul.mubr.f32.gmra.mrb[0].mxu0 %v1597
        %v1974 = vpop.f32.mrb[0].mxu0
        %v1975 = vadd.f32 %v1626, %v1974
        %v1976 = vpop.f32.mrb[0].mxu0
        %1977 = vmatprep.mubr.f32.mxu0 0.0
        %1978 = vmatmul.mubr.f32.gmra.mrb[0].mxu0 %v1598
        %v1979 = vpop.f32.mrb[0].mxu0
        %v1980 = vadd.f32 %v1626, %v1979
        %v1981 = vpop.f32.mrb[0].mxu0
        %1982 = vmatprep.mubr.f32.mxu0 0.0
        %1983 = vmatmul.mubr.f32.gmra.mrb[0].mxu0 %v1599
        %v1984 = vpop.f32.mrb[0].mxu0
        %v1985 = vadd.f32 %v1626, %v1984
        %v1986 = vpop.f32.mrb[0].mxu0
        %1987 = vmatprep.mubr.f32.mxu0 0.0
        %1988 = vmatmul.mubr.f32.gmra.mrb[0].mxu0 %v1600
        %v1989 = vpop.f32.mrb[0].mxu0
        %v1990 = vadd.f32 %v1626, %v1989
        %v1991 = vpop.f32.mrb[0].mxu0
        %1992 = vmatprep.mubr.f32.mxu0 0.0
        %1993 = vmatmul.mubr.f32.gmra.mrb[0].mxu0 %v1601
        %v1994 = vpop.f32.mrb[0].mxu0
        %v1995 = vadd.f32 %v1626, %v1994
        %v1996 = vpop.f32.mrb[0].mxu0
        %1997 = vmatprep.mubr.f32.mxu0 0.0
        %1998 = vmatmul.mubr.f32.gmra.mrb[0].mxu0 %v1602
        %v1999 = vpop.f32.mrb[0].mxu0
        %v2000 = vadd.f32 %v1626, %v1999
        %v2001 = vpop.f32.mrb[0].mxu0
        %2002 = vmatprep.mubr.f32.mxu0 0.0
        %2003 = vmatmul.mubr.f32.gmra.mrb[0].mxu0 %v1603
        %v2004 = vpop.f32.mrb[0].mxu0
        %v2005 = vadd.f32 %v1626, %v2004
        %v2006 = vpop.f32.mrb[0].mxu0
        %2007 = vmatprep.mubr.f32.mxu0 0.0
        %2008 = vmatmul.mubr.f32.gmra.mrb[0].mxu0 %v1604
        %v2009 = vpop.f32.mrb[0].mxu0
        %v2010 = vadd.f32 %v1626, %v2009
        %v2011 = vpop.f32.mrb[0].mxu0
        %2012 = vdwg.mxu0
        %v2013 = vmax.f32 %v1695, 0.0
        %v2014 = vmax.f32 %v1700, 0.0
        %v2015 = vmax.f32 %v1705, 0.0
        %v2016 = vmax.f32 %v1710, 0.0
        %v2017 = vmax.f32 %v1715, 0.0
        %v2018 = vmax.f32 %v1720, 0.0
        %v2019 = vmax.f32 %v1725, 0.0
        %v2020 = vmax.f32 %v1730, 0.0
        %v2021 = vmax.f32 %v1735, 0.0
        %v2022 = vmax.f32 %v1740, 0.0
        %v2023 = vmax.f32 %v1745, 0.0
        %v2024 = vmax.f32 %v1750, 0.0
        %v2025 = vmax.f32 %v1755, 0.0
        %v2026 = vmax.f32 %v1760, 0.0
        %v2027 = vmax.f32 %v1765, 0.0
        %v2028 = vmax.f32 %v1770, 0.0
        %v2029 = vmax.f32 %v1775, 0.0
        %v2030 = vmax.f32 %v1780, 0.0
        %v2031 = vmax.f32 %v1785, 0.0
        %v2032 = vmax.f32 %v1790, 0.0
        %v2033 = vmax.f32 %v1795, 0.0
        %v2034 = vmax.f32 %v1800, 0.0
        %v2035 = vmax.f32 %v1805, 0.0
        %v2036 = vmax.f32 %v1810, 0.0
        %v2037 = vmax.f32 %v1815, 0.0
        %v2038 = vmax.f32 %v1820, 0.0
        %v2039 = vmax.f32 %v1825, 0.0
        %v2040 = vmax.f32 %v1830, 0.0
        %v2041 = vmax.f32 %v1835, 0.0
        %v2042 = vmax.f32 %v1840, 0.0
        %v2043 = vmax.f32 %v1845, 0.0
        %v2044 = vmax.f32 %v1850, 0.0
        %v2045 = vmax.f32 %v1855, 0.0
        %v2046 = vmax.f32 %v1860, 0.0
        %v2047 = vmax.f32 %v1865, 0.0
        %v2048 = vmax.f32 %v1870, 0.0
        %v2049 = vmax.f32 %v1875, 0.0
        %v2050 = vmax.f32 %v1880, 0.0
        %v2051 = vmax.f32 %v1885, 0.0
        %v2052 = vmax.f32 %v1890, 0.0
        %v2053 = vmax.f32 %v1895, 0.0
        %v2054 = vmax.f32 %v1900, 0.0
        %v2055 = vmax.f32 %v1905, 0.0
        %v2056 = vmax.f32 %v1910, 0.0
        %v2057 = vmax.f32 %v1915, 0.0
        %v2058 = vmax.f32 %v1920, 0.0
        %v2059 = vmax.f32 %v1925, 0.0
        %v2060 = vmax.f32 %v1930, 0.0
        %v2061 = vmax.f32 %v1935, 0.0
        %v2062 = vmax.f32 %v1940, 0.0
        %v2063 = vmax.f32 %v1945, 0.0
        %v2064 = vmax.f32 %v1950, 0.0
        %v2065 = vmax.f32 %v1955, 0.0
        %v2066 = vmax.f32 %v1960, 0.0
        %v2067 = vmax.f32 %v1965, 0.0
        %v2068 = vmax.f32 %v1970, 0.0
        %v2069 = vmax.f32 %v1975, 0.0
        %v2070 = vmax.f32 %v1980, 0.0
        %v2071 = vmax.f32 %v1985, 0.0
        %v2072 = vmax.f32 %v1990, 0.0
        %v2073 = vmax.f32 %v1995, 0.0
        %v2074 = vmax.f32 %v2000, 0.0
        %v2075 = vmax.f32 %v2005, 0.0
        %v2076 = vmax.f32 %v2010, 0.0
        %v2077 = vld [vmem:[%s8] sm:$0x7]
        %v2078 = vld [vmem:[%s9] sm:$0x7]
        %2080 = vset.pattern.permute.xlu0 0
        %2081 = vperm.xlu0 %2080, %v2078
        %v2082 = vpop.permute.xlu0 %2081
        %2084 = vmatprep.subr.mxu0 0.0
        %2085 = vmatpush1.xpose.msra.mxu0 %v2013
        %2086 = vmatprep.subr.mxu0 0.0
        %2087 = vmatpush1.xpose.msra.mxu0 %v2014
        %2088 = vmatprep.subr.mxu0 0.0
        %2089 = vmatpush1.xpose.msra.mxu0 %v2015
        %2090 = vmatprep.subr.mxu0 0.0
        %2091 = vmatpush1.xpose.msra.mxu0 %v2016
        %2092 = vmatprep.subr.mxu0 0.0
        %2093 = vmatpush1.xpose.msra.mxu0 %v2017
        %2094 = vmatprep.subr.mxu0 0.0
        %2095 = vmatpush1.xpose.msra.mxu0 %v2018
        %2096 = vmatprep.subr.mxu0 0.0
        %2097 = vmatpush1.xpose.msra.mxu0 %v2019
        %2098 = vmatprep.subr.mxu0 0.0
        %2099 = vmatpush1.xpose.msra.mxu0 %v2020
        %2100 = vmatprep.subr.mxu0 0.0
        %2101 = vmatpush1.xpose.msra.mxu0 %v2021
        %2102 = vmatprep.subr.mxu0 0.0
        %2103 = vmatpush1.xpose.msra.mxu0 %v2022
        %2104 = vmatprep.subr.mxu0 0.0
        %2105 = vmatpush1.xpose.msra.mxu0 %v2023
        %2106 = vmatprep.subr.mxu0 0.0
        %2107 = vmatpush1.xpose.msra.mxu0 %v2024
        %2108 = vmatprep.subr.mxu0 0.0
        %2109 = vmatpush1.xpose.msra.mxu0 %v2025
        %2110 = vmatprep.subr.mxu0 0.0
        %2111 = vmatpush1.xpose.msra.mxu0 %v2026
        %2112 = vmatprep.subr.mxu0 0.0
        %2113 = vmatpush1.xpose.msra.mxu0 %v2027
        %2114 = vmatprep.subr.mxu0 0.0
        %2115 = vmatpush1.xpose.msra.mxu0 %v2028
        %2116 = vmatprep.subr.mxu0 0.0
        %2117 = vmatpush1.xpose.msra.mxu0 %v2029
        %2118 = vmatprep.subr.mxu0 0.0
        %2119 = vmatpush1.xpose.msra.mxu0 %v2030
        %2120 = vmatprep.subr.mxu0 0.0
        %2121 = vmatpush1.xpose.msra.mxu0 %v2031
        %2122 = vmatprep.subr.mxu0 0.0
        %2123 = vmatpush1.xpose.msra.mxu0 %v2032
        %2124 = vmatprep.subr.mxu0 0.0
        %2125 = vmatpush1.xpose.msra.mxu0 %v2033
        %2126 = vmatprep.subr.mxu0 0.0
        %2127 = vmatpush1.xpose.msra.mxu0 %v2034
        %2128 = vmatprep.subr.mxu0 0.0
        %2129 = vmatpush1.xpose.msra.mxu0 %v2035
        %2130 = vmatprep.subr.mxu0 0.0
        %2131 = vmatpush1.xpose.msra.mxu0 %v2036
        %2132 = vmatprep.subr.mxu0 0.0
        %2133 = vmatpush1.xpose.msra.mxu0 %v2037
        %2134 = vmatprep.subr.mxu0 0.0
        %2135 = vmatpush1.xpose.msra.mxu0 %v2038
        %2136 = vmatprep.subr.mxu0 0.0
        %2137 = vmatpush1.xpose.msra.mxu0 %v2039
        %2138 = vmatprep.subr.mxu0 0.0
        %2139 = vmatpush1.xpose.msra.mxu0 %v2040
        %2140 = vmatprep.subr.mxu0 0.0
        %2141 = vmatpush1.xpose.msra.mxu0 %v2041
        %2142 = vmatprep.subr.mxu0 0.0
        %2143 = vmatpush1.xpose.msra.mxu0 %v2042
        %2144 = vmatprep.subr.mxu0 0.0
        %2145 = vmatpush1.xpose.msra.mxu0 %v2043
        %2146 = vmatprep.subr.mxu0 0.0
        %2147 = vmatpush1.xpose.msra.mxu0 %v2044
        %2148 = vmatprep.mubr.f32.mxu0 0.0
        %2149 = vmatmul.mubr.f32.gmra.mrb[0].mxu0 %v2077
        %v2150 = vpop.f32.mrb[0].mxu0
        %v2151 = vadd.f32 %v2082, %v2150
        %v2152 = vpop.f32.mrb[0].mxu0
        %v2153 = vadd.f32 %v2082, %v2152
        %2154 = vdwg.mxu0
        %2155 = vmatprep.subr.mxu0 0.0
        %2156 = vmatpush1.xpose.msra.mxu0 %v2045
        %2157 = vmatprep.subr.mxu0 0.0
        %2158 = vmatpush1.xpose.msra.mxu0 %v2046
        %2159 = vmatprep.subr.mxu0 0.0
        %2160 = vmatpush1.xpose.msra.mxu0 %v2047
        %2161 = vmatprep.subr.mxu0 0.0
        %2162 = vmatpush1.xpose.msra.mxu0 %v2048
        %2163 = vmatprep.subr.mxu0 0.0
        %2164 = vmatpush1.xpose.msra.mxu0 %v2049
        %2165 = vmatprep.subr.mxu0 0.0
        %2166 = vmatpush1.xpose.msra.mxu0 %v2050
        %2167 = vmatprep.subr.mxu0 0.0
        %2168 = vmatpush1.xpose.msra.mxu0 %v2051
        %2169 = vmatprep.subr.mxu0 0.0
        %2170 = vmatpush1.xpose.msra.mxu0 %v2052
        %2171 = vmatprep.subr.mxu0 0.0
        %2172 = vmatpush1.xpose.msra.mxu0 %v2053
        %2173 = vmatprep.subr.mxu0 0.0
        %2174 = vmatpush1.xpose.msra.mxu0 %v2054
        %2175 = vmatprep.subr.mxu0 0.0
        %2176 = vmatpush1.xpose.msra.mxu0 %v2055
        %2177 = vmatprep.subr.mxu0 0.0
        %2178 = vmatpush1.xpose.msra.mxu0 %v2056
        %2179 = vmatprep.subr.mxu0 0.0
        %2180 = vmatpush1.xpose.msra.mxu0 %v2057
        %2181 = vmatprep.subr.mxu0 0.0
        %2182 = vmatpush1.xpose.msra.mxu0 %v2058
        %2183 = vmatprep.subr.mxu0 0.0
        %2184 = vmatpush1.xpose.msra.mxu0 %v2059
        %2185 = vmatprep.subr.mxu0 0.0
        %2186 = vmatpush1.xpose.msra.mxu0 %v2060
        %2187 = vmatprep.subr.mxu0 0.0
        %2188 = vmatpush1.xpose.msra.mxu0 %v2061
        %2189 = vmatprep.subr.mxu0 0.0
        %2190 = vmatpush1.xpose.msra.mxu0 %v2062
        %2191 = vmatprep.subr.mxu0 0.0
        %2192 = vmatpush1.xpose.msra.mxu0 %v2063
        %2193 = vmatprep.subr.mxu0 0.0
        %2194 = vmatpush1.xpose.msra.mxu0 %v2064
        %2195 = vmatprep.subr.mxu0 0.0
        %2196 = vmatpush1.xpose.msra.mxu0 %v2065
        %2197 = vmatprep.subr.mxu0 0.0
        %2198 = vmatpush1.xpose.msra.mxu0 %v2066
        %2199 = vmatprep.subr.mxu0 0.0
        %2200 = vmatpush1.xpose.msra.mxu0 %v2067
        %2201 = vmatprep.subr.mxu0 0.0
        %2202 = vmatpush1.xpose.msra.mxu0 %v2068
        %2203 = vmatprep.subr.mxu0 0.0
        %2204 = vmatpush1.xpose.msra.mxu0 %v2069
        %2205 = vmatprep.subr.mxu0 0.0
        %2206 = vmatpush1.xpose.msra.mxu0 %v2070
        %2207 = vmatprep.subr.mxu0 0.0
        %2208 = vmatpush1.xpose.msra.mxu0 %v2071
        %2209 = vmatprep.subr.mxu0 0.0
        %2210 = vmatpush1.xpose.msra.mxu0 %v2072
        %2211 = vmatprep.subr.mxu0 0.0
        %2212 = vmatpush1.xpose.msra.mxu0 %v2073
        %2213 = vmatprep.subr.mxu0 0.0
        %2214 = vmatpush1.xpose.msra.mxu0 %v2074
        %2215 = vmatprep.subr.mxu0 0.0
        %2216 = vmatpush1.xpose.msra.mxu0 %v2075
        %2217 = vmatprep.subr.mxu0 0.0
        %2218 = vmatpush1.xpose.msra.mxu0 %v2076
        %2219 = vmatprep.mubr.f32.mxu0 0.0
        %2220 = vmatmul.mubr.f32.gmra.mrb[0].mxu0 %v2077
        %v2221 = vpop.f32.mrb[0].mxu0
        %v2222 = vadd.f32 %v2082, %v2221
        %v2223 = vpop.f32.mrb[0].mxu0
        %v2224 = vadd.f32 %v2082, %v2223
        %2225 = vdwg.mxu0
        %v2230 = vcombine.low %v2151, %v2153
        %v2231 = vcombine.low %v2222, %v2224
        %2234 = vst [vmem:[%s460] sm:$0x77] %v2230
        %2235 = vst [vmem:[%s460 + $0x8] sm:$0x77] %v2231
        %s2236 = smul.u32 4, %s30
        %p2237 = scmp.lt.s32.totalorder %s31, 1
        %s2238 = scalar_select %p2237, %s31, 1
        %p2239 = scmp.lt.s32.totalorder %s2236, 7
        %s2240 = scalar_select %p2239, %s2236, 7
        %s2241 = smul.addr %s2238, 8
        %s2242 = sadd.s32 %s2240, %s2241
        %s2243 = smul.addr %s2242, 4
        %s2244 = scalar_lea.vmem %s10, %s2243
        // Predicated region
        $region77: #{tpu_custom_call.1} parent=59 // pred_check
          %p2245 = pneg %p278
        $region78: #{tpu_custom_call.1} parent=59 // pred_check_branch
          %2247 = sbr.rel (%p2245) target = $region80
        $region79: #{tpu_custom_call.1} parent=59 // pred_region
          %s2248 = smul.u32 4, %s30
        $region80: #{tpu_custom_call.1} parent=59 // pred_fallthru
          _
      $region60: #{tpu_custom_call.1} parent=5 // pred_fallthru
        _
      %p2249 = scmp.le.s32.totalorder 2, %s21
      // Predicated region
      $region81: #{tpu_custom_call.1} parent=5 // pred_check
        %p2250 = pneg %p2249
      $region82: #{tpu_custom_call.1} parent=5 // pred_check_branch
        %2252 = sbr.rel (%p2250) target = $region84
      $region83: #{tpu_custom_call.1} parent=5 // pred_region
        %s2253 = ssub.s32 %s21, 2
        // Predicated region
        $region85: #{tpu_custom_call.1} parent=83 // pred_check
          %p2254 = pneg %p284
        $region86: #{tpu_custom_call.1} parent=83 // pred_check_branch
          %2256 = sbr.rel (%p2254) target = $region88
        $region87: #{tpu_custom_call.1} parent=83 // pred_region
          %s2257 = smul.u32 4, %s32
          %p2258 = scmp.lt.s32.totalorder %s33, 1
          %s2259 = scalar_select %p2258, %s33, 1
          %p2260 = scmp.lt.s32.totalorder %s2257, 7
          %s2261 = scalar_select %p2260, %s2257, 7
          %s2262 = smul.addr %s2259, 8
          %s2263 = sadd.s32 %s2261, %s2262
          %s2264 = smul.addr %s2263, 4
          %s2265 = scalar_lea.vmem %s10, %s2264
        $region88: #{tpu_custom_call.1} parent=83 // pred_fallthru
          _
      $region84: #{tpu_custom_call.1} parent=5 // pred_fallthru
        _
    $region6: #{tpu_custom_call.1} parent=1 // loop_footer
      %s25 = sadd.s32 1, %s21
    $region7: #{tpu_custom_call.1} parent=1 // loop_footer_branch
      %20 = sbr.rel target = $region3
    $region8: #{tpu_custom_call.1} parent=1 // loop_exit
      _
    %2266 = vsyncpa [#allocation3], 1
    %s2267 = scalar_lea.sflag [#allocation3], 1
    %2268 = vsyncpa %s2267, 1
    %2269 = vsyncpa [#allocation5], 1
    %2270 = vsyncpa [#allocation8], 1

</llo_original>
